<compile_context>
chip_gen: v7x
topology: tpu7x:2x2x1
jax: 0.10.0
libtpu: 0.0.40
codegen_flags: <defaults>
</compile_context>

<pallas_src>
import jax
import jax.numpy as jnp
from jax.experimental import pallas as pl
from jax.experimental.pallas import tpu as pltpu

LANE = 128        # pad feature/class dims to full lanes (lane-dense stores)
NODE_PAD = 512    # pad the node dim so 256/512-multiple tiles always divide evenly


# ---------------------------------------------------------------------------
# helpers
# ---------------------------------------------------------------------------

def _round_up(x, m):
    return ((x + m - 1) // m) * m


def _pad2d(a, rows, cols, value=0.0):
    r, c = a.shape
    if r == rows and c == cols:
        return a
    return jnp.pad(a, ((0, rows - r), (0, cols - c)), constant_values=value)


_VMEM_BUDGET_CACHE = None


def _vmem_budget_bytes():
    """3/4 of physical VMEM: ~96 MiB on v5e/v6e (128 MiB), ~48 MiB on v7x (64 MiB)."""
    global _VMEM_BUDGET_CACHE
    if _VMEM_BUDGET_CACHE is None:
        cap = 64 * 1024 * 1024            # conservative fallback (v7x-sized)
        try:
            cap = int(pltpu.get_tpu_info().vmem_capacity_bytes)
        except Exception:
            pass
        _VMEM_BUDGET_CACHE = (cap * 3) // 4
    return _VMEM_BUDGET_CACHE


def _pick_tile(n, cap):
    """Largest MXU/DMA-friendly tile <= cap that divides n."""
    for cand in (2048, 1024, 512, 256, 128):
        if cand <= cap and n % cand == 0:
            return cand
    return n


# ---------------------------------------------------------------------------
# hoisted linear kernel:  H = X @ W + b   (qGCNConv applies lin BEFORE propagate)
# ---------------------------------------------------------------------------

def _linear_kernel(x_ref, w_ref, b_ref, h_ref):
    h = jnp.dot(x_ref[...], w_ref[...], preferred_element_type=jnp.float32)
    h_ref[...] = (h + b_ref[...]).astype(h_ref.dtype)


def linear(x, w, b):
    n_p, fin_p = x.shape
    fout_p = w.shape[1]
    tm = _pick_tile(n_p, cap=min(512, max(128, n_p // 2)))   # keep >= 2 row tiles
    assert n_p % tm == 0
    cost = pl.CostEstimate(
        flops=2 * n_p * fin_p * fout_p,
        transcendentals=0,
        bytes_accessed=int(n_p * fin_p * 2 + fin_p * fout_p * 2 + fout_p * 4
                           + n_p * fout_p * 2),
    )
    return pl.pallas_call(
        _linear_kernel,
        grid=(n_p // tm,),
        in_specs=[
            pl.BlockSpec((tm, fin_p), lambda i: (i, 0)),
            pl.BlockSpec((fin_p, fout_p), lambda i: (0, 0)),
            pl.BlockSpec((1, fout_p), lambda i: (0, 0)),
        ],
        out_specs=pl.BlockSpec((tm, fout_p), lambda i: (i, 0)),
        out_shape=jax.ShapeDtypeStruct((n_p, fout_p), jnp.bfloat16),
        compiler_params=pltpu.CompilerParams(
            dimension_semantics=("parallel",),
            vmem_limit_bytes=_vmem_budget_bytes(),
        ),
        cost_estimate=cost,
    )(x, w, b)


# ---------------------------------------------------------------------------
# tiled A @ H aggregation with fused epilogue
# ---------------------------------------------------------------------------

def _make_agg_kernel(apply_linear, epilogue, valid_out, h_resident, tk):
    """Tiled A @ H accumulation with a fused finalize epilogue.

    apply_linear=True : finalize computes (acc @ W) + rowsum(A)*b == A @ (X W + b).
    epilogue          : "bn_relu" | "log_softmax" | "none".
    h_resident=True   : H is one VMEM-resident block; kernel slices the k-th window.
    """
    def kernel(*refs):
        it = iter(refs)
        a_ref = next(it)
        h_ref = next(it)
        if apply_linear:
            w_ref = next(it)
            b_ref = next(it)
            rs_ref = next(it)
        if epilogue == "bn_relu":
            g_ref = next(it)
            be_ref = next(it)
            mu_ref = next(it)
            v_ref = next(it)
        o_ref = next(it)
        acc_ref = next(it)

        k = pl.program_id(1)

        @pl.when(k == 0)
        def _init():
            acc_ref[...] = jnp.zeros_like(acc_ref)

        if h_resident:
            h_blk = h_ref[pl.ds(pl.multiple_of(k * tk, tk), tk), :]
        else:
            h_blk = h_ref[...]
        # dominant N^2 term: bf16 MXU matmul with f32 accumulation
        acc_ref[...] += jnp.dot(a_ref[...], h_blk,
                                preferred_element_type=jnp.float32)

        @pl.when(k == pl.num_programs(1) - 1)
        def _finalize():
            y = acc_ref[...]
            if apply_linear:
                # single bf16 MXU pass (W is already bf16); rowsum(A)*b preserves
                # qGCNConv's bias-before-aggregation semantics: (A X) W + (A 1) b.
                y = jnp.dot(y.astype(jnp.bfloat16), w_ref[...],
                            preferred_element_type=jnp.float32)
                y = y + rs_ref[...] * b_ref[...]
            if epilogue == "bn_relu":
                inv_std = jax.lax.rsqrt(v_ref[...] + 1e-5)
                y = (y - mu_ref[...]) * inv_std * g_ref[...] + be_ref[...]
                y = jnp.maximum(y, 0.0)
            elif epilogue == "log_softmax":
                cols = jax.lax.broadcasted_iota(jnp.int32, y.shape, 1)
                valid = cols < valid_out
                ym = jnp.where(valid, y, jnp.float32(-1e30))
                m = jnp.max(ym, axis=-1, keepdims=True)
                z = ym - m
                ez = jnp.where(valid, jnp.exp(z), 0.0)
                lse = jnp.log(jnp.sum(ez, axis=-1, keepdims=True))
                y = jnp.where(valid, z - lse, 0.0)
            o_ref[...] = y.astype(o_ref.dtype)

    return kernel


def _agg_vmem_bytes(tm, tk, h_rows, h_width, fout_p, out_itemsize):
    a_bytes = 2 * tm * tk * 2                       # double-buffered bf16 A tiles
    h_bytes = 2 * h_rows * h_width * 2              # conservative: 2 bufs even if resident
    o_bytes = 2 * tm * fout_p * out_itemsize
    acc_bytes = tm * h_width * 4
    small = 2 * (h_width * fout_p * 2 + 6 * fout_p * 4 + tm * 4)   # W/b/bn/rowsum
    return a_bytes + h_bytes + o_bytes + acc_bytes + small


def gcn_layer(a, x, w, b, *, rowsum=None, bn=None, epilogue="none", valid_out=0,
              aggregate_first=False, out_dtype=jnp.bfloat16,
              tm=None, tk=None, h_resident=None):
    """One GCN layer; BN/ReLU or log_softmax fused into the aggregation finalize.

    aggregate_first=True  -> epi((A @ X) @ W + rowsum(A) * b)   (padded Fin < Fout)
    aggregate_first=False -> epi(A @ (X @ W + b))               (padded Fout <= Fin)
    Both equal epi(A @ (X W + b)), i.e. qGCNConv's bias-before-aggregation semantics.
    """
    n_p = a.shape[0]
    fout_p = w.shape[1]
    out_sz = jnp.dtype(out_dtype).itemsize
    budget = _vmem_budget_bytes()

    if aggregate_first:
        assert rowsum is not None
        h = x                              # stream raw features; W applied in finalize
    else:
        h = linear(x, w, b)                # hoisted X @ W + b (computed once)
    h_width = h.shape[1]

    # ---- tile selection (generation-aware via the VMEM budget) ----------------
    if tk is None:
        tk = _pick_tile(n_p, cap=min(2048, n_p))                    # big contiguous A DMAs
    if tm is None:
        tm = _pick_tile(n_p, cap=min(512, max(128, n_p // 2)))      # keep >= 2 row tiles
    assert n_p % tm == 0 and n_p % tk == 0

    if h_resident is None:
        h_resident = _agg_vmem_bytes(tm, tk, n_p, h_width, fout_p, out_sz) <= budget
    if not h_resident:
        # shrink tiles until the streamed (tiled-H) layout fits the budget
        while tk > 128 and _agg_vmem_bytes(tm, tk, tk, h_width, fout_p, out_sz) > budget:
            tk //= 2
        while tm > 128 and _agg_vmem_bytes(tm, tk, tk, h_width, fout_p, out_sz) > budget:
            tm //= 2
        assert n_p % tm == 0 and n_p % tk == 0

    inputs = [a, h]
    in_specs = [
        pl.BlockSpec((tm, tk), lambda i, k: (i, k)),                # A tile (bf16)
        (pl.BlockSpec((n_p, h_width), lambda i, k: (0, 0)) if h_resident
         else pl.BlockSpec((tk, h_width), lambda i, k: (k, 0))),    # H resident / tiled
    ]
    if aggregate_first:
        inputs += [w, b, rowsum]
        in_specs += [
            pl.BlockSpec((h_width, fout_p), lambda i, k: (0, 0)),
            pl.BlockSpec((1, fout_p), lambda i, k: (0, 0)),
            pl.BlockSpec((tm, 1), lambda i, k: (i, 0)),
        ]
    if epilogue == "bn_relu":
        inputs += list(bn)
        in_specs += [pl.BlockSpec((1, fout_p), lambda i, k: (0, 0))] * 4

    kernel = _make_agg_kernel(aggregate_first, epilogue, valid_out, h_resident, tk)

    flops = 2 * n_p * n_p * h_width
    if aggregate_first:
        flops += 2 * n_p * h_width * fout_p
    h_stream = n_p * h_width * 2 * (1 if h_resident else max(1, n_p // tm))
    cost = pl.CostEstimate(
        flops=int(flops),
        transcendentals=int(n_p * fout_p) if epilogue == "log_softmax" else 0,
        bytes_accessed=int(n_p * n_p * 2 + h_stream + n_p * fout_p * out_sz),
    )

    return pl.pallas_call(
        kernel,
        grid=(n_p // tm, n_p // tk),
        in_specs=in_specs,
        out_specs=pl.BlockSpec((tm, fout_p), lambda i, k: (i, 0)),
        out_shape=jax.ShapeDtypeStruct((n_p, fout_p), out_dtype),
        scratch_shapes=[pltpu.VMEM((tm, h_width), jnp.float32)],
        compiler_params=pltpu.CompilerParams(
            dimension_semantics=("parallel", "arbitrary"),
            vmem_limit_bytes=budget,
        ),
        cost_estimate=cost,
    )(*inputs)


# ---------------------------------------------------------------------------
# JAX glue: normalization, parameter construction, forward, reference
# ---------------------------------------------------------------------------

def gcn_norm_dense(adj):
    """D^-1/2 (A + I) D^-1/2 (add_self_loops=True, as in PyG gcn_norm)."""
    n = adj.shape[0]
    a_hat = adj + jnp.eye(n, dtype=adj.dtype)
    deg = jnp.sum(a_hat, axis=1)
    d_inv_sqrt = jnp.where(deg > 0, 1.0 / jnp.sqrt(deg), 0.0)
    return d_inv_sqrt[:, None] * a_hat * d_inv_sqrt[None, :]


def build_layers(key, in_feats, hidden, classes, num_layers):
    dims = [in_feats] + [hidden] * (num_layers - 1) + [classes]
    layers = []
    for li in range(num_layers):
        fin, fout = dims[li], dims[li + 1]
        fin_p, fout_p = _round_up(fin, LANE), _round_up(fout, LANE)
        key, kw, kbias, kg, kb, km, kv = jax.random.split(key, 7)
        scale = jnp.sqrt(2.0 / (fin + fout)).astype(jnp.float32)
        w = jax.random.normal(kw, (fin, fout), jnp.float32) * scale
        b = 0.05 * jax.random.normal(kbias, (1, fout), jnp.float32)
        is_last = li == num_layers - 1
        if not is_last:
            gamma = 1.0 + 0.1 * jax.random.normal(kg, (1, fout), jnp.float32)
            beta = 0.1 * jax.random.normal(kb, (1, fout), jnp.float32)
            mean = 0.05 * jax.random.normal(km, (1, fout), jnp.float32)
            var = 1.0 + 0.1 * jax.random.uniform(kv, (1, fout), jnp.float32)
            bn = (
                _pad2d(gamma, 1, fout_p),
                _pad2d(beta, 1, fout_p),
                _pad2d(mean, 1, fout_p),
                _pad2d(var, 1, fout_p, value=1.0),   # keep rsqrt well-behaved on pad
            )
        else:
            bn = None
        layers.append(dict(
            w=_pad2d(w, fin_p, fout_p).astype(jnp.bfloat16),
            b=_pad2d(b, 1, fout_p),
            bn=bn,
            # decide on PADDED dims; prefer A @ (XW + b) (False) on ties
            aggregate_first=fin_p < fout_p,
            epilogue=("log_softmax" if is_last else "bn_relu"),
            valid_out=fout,
            out_dtype=(jnp.float32 if is_last else jnp.bfloat16),
        ))
    return layers


def qgcn_forward(x_p, adj_p, rowsum_p, layers, *, force_h_resident=None,
                 tile_override=None):
    tm, tk = (None, None) if tile_override is None else tile_override
    h = x_p
    for spec in layers:
        h = gcn_layer(adj_p, h, spec["w"], spec["b"],
                      rowsum=rowsum_p if spec["aggregate_first"] else None,
                      bn=spec["bn"], epilogue=spec["epilogue"],
                      valid_out=spec["valid_out"],
                      aggregate_first=spec["aggregate_first"],
                      out_dtype=spec["out_dtype"],
                      tm=tm, tk=tk, h_resident=force_h_resident)
    return h


def qgcn_reference(x_p, adj_p, rowsum_p, layers):
    """Pure-JAX reference mirroring the kernel's bf16 cast points."""
    a = adj_p.astype(jnp.float32)
    h = x_p
    for spec in layers:
        w = spec["w"].astype(jnp.float32)
        b = spec["b"]
        hf = h.astype(jnp.float32)
        if spec["aggregate_first"]:
            ax = (a @ hf).astype(jnp.bfloat16).astype(jnp.float32)
            y = ax @ w + rowsum_p * b
        else:
            xw = (hf @ w + b).astype(jnp.bfloat16).astype(jnp.float32)
            y = a @ xw
        if spec["epilogue"] == "bn_relu":
            g, be, mu, v = spec["bn"]
            y = (y - mu) * jax.lax.rsqrt(v + 1e-5) * g + be
            h = jnp.maximum(y, 0.0).astype(jnp.bfloat16)
        else:
            logits = y[:, :spec["valid_out"]]
            m = jnp.max(logits, axis=-1, keepdims=True)
            z = logits - m
            lse = jnp.log(jnp.sum(jnp.exp(z), axis=-1, keepdims=True))
            h = z - lse
    return h


# ---------------------------------------------------------------------------
# main
# ---------------------------------------------------------------------------

if __name__ == "__main__":
    N = 256           # num_nodes
    IN_FEATS = 16     # dataset.num_node_features
    HIDDEN = 192      # hidden_channels (pads to 256 -> exercises aggregate_first path)
    CLASSES = 8       # out_channels
    NUM_LAYERS = 3

    key = jax.random.PRNGKey(0)
    key, kx, ka = jax.random.split(key, 3)

    x = jax.random.normal(kx, (N, IN_FEATS), dtype=jnp.float32)

    # random symmetric adjacency (no self loops; gcn_norm adds them)
    rand = jax.random.uniform(ka, (N, N))
    adj = (rand < 0.1).astype(jnp.float32)
    adj = jnp.maximum(adj, adj.T)
    adj = adj * (1.0 - jnp.eye(N, dtype=jnp.float32))
    adj_norm = gcn_norm_dense(adj)

    layers = build_layers(key, IN_FEATS, HIDDEN, CLASSES, NUM_LAYERS)

    # pad to TPU-friendly shapes; adjacency (dominant byte stream) and streamed
    # activations are bf16, accumulation stays f32 inside the kernels.
    n_p = _round_up(N, NODE_PAD)
    fin_p = _round_up(IN_FEATS, LANE)
    adj_p = _pad2d(adj_norm, n_p, n_p).astype(jnp.bfloat16)
    x_p = _pad2d(x, n_p, fin_p).astype(jnp.bfloat16)
    rowsum_p = jnp.sum(adj_p.astype(jnp.float32), axis=1, keepdims=True)   # (n_p, 1)

    out_p = jax.block_until_ready(qgcn_forward(x_p, adj_p, rowsum_p, layers))
    out = out_p[:N, :CLASSES]

    ref = qgcn_reference(x_p, adj_p, rowsum_p, layers)[:N]

    assert out.shape == (N, CLASSES)
    assert bool(jnp.all(jnp.isfinite(out)))
    # log_softmax rows should sum to ~1 in probability space
    assert bool(jnp.allclose(jnp.sum(jnp.exp(out), axis=-1), 1.0, atol=1e-3))
    assert bool(jnp.allclose(out, ref, atol=2e-2, rtol=2e-2))

    # also exercise the streamed (non-resident H), multi-K-tile accumulation path
    out_tiled = jax.block_until_ready(
        qgcn_forward(x_p, adj_p, rowsum_p, layers,
                     force_h_resident=False, tile_override=(128, 128)))
    assert bool(jnp.allclose(out_tiled[:N, :CLASSES], ref, atol=2e-2, rtol=2e-2))

    print("KERNEL_OK")
</pallas_src>

<mosaic_0001>
module attributes {stable_mosaic.version = 11 : i64} {
  func.func @kernel(%arg0: i32, %arg1: i32, %arg2: memref<256x512xbf16, #tpu.memory_space<vmem>>, %arg3: memref<512x128xbf16, #tpu.memory_space<vmem>>, %arg4: memref<128x256xbf16, #tpu.memory_space<vmem>>, %arg5: memref<1x256xf32, #tpu.memory_space<vmem>>, %arg6: memref<256x1xf32, #tpu.memory_space<vmem>>, %arg7: memref<1x256xf32, #tpu.memory_space<vmem>>, %arg8: memref<1x256xf32, #tpu.memory_space<vmem>>, %arg9: memref<1x256xf32, #tpu.memory_space<vmem>>, %arg10: memref<1x256xf32, #tpu.memory_space<vmem>>, %arg11: memref<256x256xbf16, #tpu.memory_space<vmem>>, %arg12: memref<256x128xf32, #tpu.memory_space<vmem>>) attributes {dimension_semantics = [#tpu.dimension_semantics<parallel>, #tpu.dimension_semantics<arbitrary>], iteration_bounds = array<i64: 2, 1>, scalar_prefetch = 0 : i64, scratch_operands = 1 : i64, tpu.core_type = #tpu.core_type<tc>, window_params = [{transform_indices = @transform_0, window_bounds = array<i64: 256, 512>}, {pipeline_mode = #tpu.pipeline_mode<synchronous>, transform_indices = @transform_1, window_bounds = array<i64: 512, 128>}, {pipeline_mode = #tpu.pipeline_mode<synchronous>, transform_indices = @transform_2, window_bounds = array<i64: 128, 256>}, {pipeline_mode = #tpu.pipeline_mode<synchronous>, transform_indices = @transform_3, window_bounds = array<i64: 1, 256>}, {transform_indices = @transform_4, window_bounds = array<i64: 256, 1>}, {pipeline_mode = #tpu.pipeline_mode<synchronous>, transform_indices = @transform_5, window_bounds = array<i64: 1, 256>}, {pipeline_mode = #tpu.pipeline_mode<synchronous>, transform_indices = @transform_6, window_bounds = array<i64: 1, 256>}, {pipeline_mode = #tpu.pipeline_mode<synchronous>, transform_indices = @transform_7, window_bounds = array<i64: 1, 256>}, {pipeline_mode = #tpu.pipeline_mode<synchronous>, transform_indices = @transform_8, window_bounds = array<i64: 1, 256>}, {transform_indices = @transform_9, window_bounds = array<i64: 256, 256>}]} {
    %c0_i32 = arith.constant 0 : i32
    %0 = arith.cmpi eq, %arg1, %c0_i32 : i32
    %1 = arith.extui %0 : i1 to i32
    %c0_i32_0 = arith.constant 0 : i32
    %2 = arith.cmpi ne, %1, %c0_i32_0 : i32
    scf.if %2 {
      %cst_9 = arith.constant 0.000000e+00 : f32
      %15 = vector.broadcast %cst_9 : f32 to vector<256x128xf32>
      %c0_10 = arith.constant 0 : index
      %c0_11 = arith.constant 0 : index
      %16 = vector.load %arg12[%c0_10, %c0_11] : memref<256x128xf32, #tpu.memory_space<vmem>>, vector<256x128xf32>
      tpu.vector_store %arg12[%c0_10, %c0_11], %15 {strides = array<i32>} : memref<256x128xf32, #tpu.memory_space<vmem>>, vector<256x128xf32>,
    } else {
    }
    %c512_i32 = arith.constant 512 : i32
    %3 = arith.muli %arg1, %c512_i32 : i32
    %4 = tpu.assume_multiple %3, 512 : i32
    %5 = arith.index_cast %4 : i32 to index
    %c0 = arith.constant 0 : index
    %6 = vector.load %arg3[%5, %c0] : memref<512x128xbf16, #tpu.memory_space<vmem>>, vector<512x128xbf16>
    %c0_1 = arith.constant 0 : index
    %c0_2 = arith.constant 0 : index
    %7 = vector.load %arg12[%c0_1, %c0_2] : memref<256x128xf32, #tpu.memory_space<vmem>>, vector<256x128xf32>
    %c0_3 = arith.constant 0 : index
    %c0_4 = arith.constant 0 : index
    %8 = vector.load %arg2[%c0_3, %c0_4] : memref<256x512xbf16, #tpu.memory_space<vmem>>, vector<256x512xbf16>
    %cst = arith.constant dense<0.000000e+00> : vector<256x128xf32>
    %9 = tpu.matmul %8, %6, %cst {dimension_numbers = #tpu.dot_dimension_numbers<[1], [0], [0], [1], [0, 0, 1, 1], [], []>} : vector<256x512xbf16>, vector<512x128xbf16>, vector<256x128xf32> -> vector<256x128xf32>
    %10 = arith.addf %7, %9 : vector<256x128xf32>
    %c0_5 = arith.constant 0 : index
    %c0_6 = arith.constant 0 : index
    %11 = vector.load %arg12[%c0_5, %c0_6] : memref<256x128xf32, #tpu.memory_space<vmem>>, vector<256x128xf32>
    tpu.vector_store %arg12[%c0_5, %c0_6], %10 {strides = array<i32>} : memref<256x128xf32, #tpu.memory_space<vmem>>, vector<256x128xf32>,
    %c0_i32_7 = arith.constant 0 : i32
    %12 = arith.cmpi eq, %arg1, %c0_i32_7 : i32
    %13 = arith.extui %12 : i1 to i32
    %c0_i32_8 = arith.constant 0 : i32
    %14 = arith.cmpi ne, %13, %c0_i32_8 : i32
    scf.if %14 {
      %c0_9 = arith.constant 0 : index
      %c0_10 = arith.constant 0 : index
      %15 = vector.load %arg12[%c0_9, %c0_10] : memref<256x128xf32, #tpu.memory_space<vmem>>, vector<256x128xf32>
      %16 = arith.truncf %15 : vector<256x128xf32> to vector<256x128xbf16>
      %c0_11 = arith.constant 0 : index
      %c0_12 = arith.constant 0 : index
      %17 = vector.load %arg4[%c0_11, %c0_12] : memref<128x256xbf16, #tpu.memory_space<vmem>>, vector<128x256xbf16>
      %cst_13 = arith.constant dense<0.000000e+00> : vector<256x256xf32>
      %18 = tpu.matmul %16, %17, %cst_13 {dimension_numbers = #tpu.dot_dimension_numbers<[1], [0], [0], [1], [0, 0, 1, 1], [], []>} : vector<256x128xbf16>, vector<128x256xbf16>, vector<256x256xf32> -> vector<256x256xf32>
      %c0_14 = arith.constant 0 : index
      %c0_15 = arith.constant 0 : index
      %19 = vector.load %arg6[%c0_14, %c0_15] : memref<256x1xf32, #tpu.memory_space<vmem>>, vector<256x1xf32>
      %c0_16 = arith.constant 0 : index
      %c0_17 = arith.constant 0 : index
      %20 = vector.load %arg5[%c0_16, %c0_17] : memref<1x256xf32, #tpu.memory_space<vmem>>, vector<1x256xf32>
      %21 = vector.broadcast %19 : vector<256x1xf32> to vector<256x256xf32>
      %22 = vector.broadcast %20 : vector<1x256xf32> to vector<256x256xf32>
      %23 = arith.mulf %21, %22 : vector<256x256xf32>
      %24 = arith.addf %18, %23 : vector<256x256xf32>
      %c0_18 = arith.constant 0 : index
      %c0_19 = arith.constant 0 : index
      %25 = vector.load %arg10[%c0_18, %c0_19] : memref<1x256xf32, #tpu.memory_space<vmem>>, vector<1x256xf32>
      %cst_20 = arith.constant 9.99999974E-6 : f32
      %26 = vector.broadcast %cst_20 : f32 to vector<1x256xf32>
      %27 = arith.addf %25, %26 : vector<1x256xf32>
      %28 = math.rsqrt %27 : vector<1x256xf32>
      %c0_21 = arith.constant 0 : index
      %c0_22 = arith.constant 0 : index
      %29 = vector.load %arg9[%c0_21, %c0_22] : memref<1x256xf32, #tpu.memory_space<vmem>>, vector<1x256xf32>
      %30 = vector.broadcast %29 : vector<1x256xf32> to vector<256x256xf32>
      %31 = arith.subf %24, %30 : vector<256x256xf32>
      %32 = vector.broadcast %28 : vector<1x256xf32> to vector<256x256xf32>
      %33 = arith.mulf %31, %32 : vector<256x256xf32>
      %c0_23 = arith.constant 0 : index
      %c0_24 = arith.constant 0 : index
      %34 = vector.load %arg7[%c0_23, %c0_24] : memref<1x256xf32, #tpu.memory_space<vmem>>, vector<1x256xf32>
      %35 = vector.broadcast %34 : vector<1x256xf32> to vector<256x256xf32>
      %36 = arith.mulf %33, %35 : vector<256x256xf32>
      %c0_25 = arith.constant 0 : index
      %c0_26 = arith.constant 0 : index
      %37 = vector.load %arg8[%c0_25, %c0_26] : memref<1x256xf32, #tpu.memory_space<vmem>>, vector<1x256xf32>
      %38 = vector.broadcast %37 : vector<1x256xf32> to vector<256x256xf32>
      %39 = arith.addf %36, %38 : vector<256x256xf32>
      %cst_27 = arith.constant 0.000000e+00 : f32
      %40 = vector.broadcast %cst_27 : f32 to vector<256x256xf32>
      %41 = arith.maximumf %39, %40 : vector<256x256xf32>
      %42 = arith.truncf %41 : vector<256x256xf32> to vector<256x256xbf16>
      %c0_28 = arith.constant 0 : index
      %c0_29 = arith.constant 0 : index
      %43 = vector.load %arg11[%c0_28, %c0_29] : memref<256x256xbf16, #tpu.memory_space<vmem>>, vector<256x256xbf16>
      tpu.vector_store %arg11[%c0_28, %c0_29], %42 {strides = array<i32>} : memref<256x256xbf16, #tpu.memory_space<vmem>>, vector<256x256xbf16>,
    } else {
    }
    return
  }
  func.func @transform_0(%arg0: i32, %arg1: i32) -> (i32, i32) {
    %c0_i32 = arith.constant 0 : i32
    return %arg0, %arg1 : i32, i32
  }
  func.func @transform_1(%arg0: i32, %arg1: i32) -> (i32, i32) {
    %c0_i32 = arith.constant 0 : i32
    %c0_i32_0 = arith.constant 0 : i32
    %c0_i32_1 = arith.constant 0 : i32
    return %c0_i32, %c0_i32_0 : i32, i32
  }
  func.func @transform_2(%arg0: i32, %arg1: i32) -> (i32, i32) {
    %c0_i32 = arith.constant 0 : i32
    %c0_i32_0 = arith.constant 0 : i32
    %c0_i32_1 = arith.constant 0 : i32
    return %c0_i32, %c0_i32_0 : i32, i32
  }
  func.func @transform_3(%arg0: i32, %arg1: i32) -> (i32, i32) {
    %c0_i32 = arith.constant 0 : i32
    %c0_i32_0 = arith.constant 0 : i32
    %c0_i32_1 = arith.constant 0 : i32
    return %c0_i32, %c0_i32_0 : i32, i32
  }
  func.func @transform_4(%arg0: i32, %arg1: i32) -> (i32, i32) {
    %c0_i32 = arith.constant 0 : i32
    %c0_i32_0 = arith.constant 0 : i32
    return %arg0, %c0_i32 : i32, i32
  }
  func.func @transform_5(%arg0: i32, %arg1: i32) -> (i32, i32) {
    %c0_i32 = arith.constant 0 : i32
    %c0_i32_0 = arith.constant 0 : i32
    %c0_i32_1 = arith.constant 0 : i32
    return %c0_i32, %c0_i32_0 : i32, i32
  }
  func.func @transform_6(%arg0: i32, %arg1: i32) -> (i32, i32) {
    %c0_i32 = arith.constant 0 : i32
    %c0_i32_0 = arith.constant 0 : i32
    %c0_i32_1 = arith.constant 0 : i32
    return %c0_i32, %c0_i32_0 : i32, i32
  }
  func.func @transform_7(%arg0: i32, %arg1: i32) -> (i32, i32) {
    %c0_i32 = arith.constant 0 : i32
    %c0_i32_0 = arith.constant 0 : i32
    %c0_i32_1 = arith.constant 0 : i32
    return %c0_i32, %c0_i32_0 : i32, i32
  }
  func.func @transform_8(%arg0: i32, %arg1: i32) -> (i32, i32) {
    %c0_i32 = arith.constant 0 : i32
    %c0_i32_0 = arith.constant 0 : i32
    %c0_i32_1 = arith.constant 0 : i32
    return %c0_i32, %c0_i32_0 : i32, i32
  }
  func.func @transform_9(%arg0: i32, %arg1: i32) -> (i32, i32) {
    %c0_i32 = arith.constant 0 : i32
    %c0_i32_0 = arith.constant 0 : i32
    return %arg0, %c0_i32 : i32, i32
  }
}

</mosaic_0001>

<llo_original>
// kernel: tpu_custom_call.1
$region0: #{tpu_custom_call.1}
  #allocation0 [shape = 'u32[]', space=smem, size = 0x4, offset = 0x4, fixed_abs, tag = 'smem constant byte address 0x4 - core index']
  #allocation1 [shape = 'u32[144,128]{1,0:T(1,128)}', space=vmem, size = 0x12000, scoped, tag = 'internal scratch']
  #allocation2 [shape = 'f32[256,128]{1,0:T(8,128)}', space=vmem, size = 0x20000, scoped, tag = 'scratch operand']
  %s0 = inlined_call_operand.hbm [shape: bf16[512,512], index: 0, kind: input, shape index: {}]
  %s1 = inlined_call_operand.vmem [shape: bf16[512,128], index: 1, kind: input, shape index: {}]
  %s2 = inlined_call_operand.vmem [shape: bf16[128,256], index: 2, kind: input, shape index: {}]
  %s3 = inlined_call_operand.vmem [shape: f32[1,256], index: 3, kind: input, shape index: {}]
  %s4 = inlined_call_operand.vmem [shape: f32[512,1], index: 4, kind: input, shape index: {}]
  %s5 = inlined_call_operand.vmem [shape: f32[1,256], index: 5, kind: input, shape index: {}]
  %s6 = inlined_call_operand.vmem [shape: f32[1,256], index: 6, kind: input, shape index: {}]
  %s7 = inlined_call_operand.vmem [shape: f32[1,256], index: 7, kind: input, shape index: {}]
  %s8 = inlined_call_operand.vmem [shape: f32[1,256], index: 8, kind: input, shape index: {}]
  %s9 = inlined_call_operand.hbm [shape: bf16[512,256], index: 9, kind: output, shape index: {}]
  %s10 = sld [smem:[#allocation0]]
  $region81: #{tpu_custom_call.1} parent=0
    _
  %s12 = ssub.s32 1, %s10
  %s13 = scalar_select 0, %s12, %s10
  $region1: #{tpu_custom_call.1} parent=0
    #allocation3 [shape = 'u8[524288]{0}', space=vmem, size = 0x80000, scoped, tag = 'input window, operand 0']
    #allocation4 [shape = 's32[2]{0}', space=sflag, size = 0x8, scoped, tag = 'scoped memory for tpu_custom_call.1']
    #allocation5 [shape = 's32[2]{0}', space=sflag, size = 0x8, scoped, tag = 'scoped memory for tpu_custom_call.1']
    #allocation6 [shape = 'u8[262144]{0}', space=vmem, size = 0x40000, scoped, tag = 'output window, operand 0']
    %14 = vsyncpa [#allocation4], 0
    %s15 = scalar_lea.sflag [#allocation4], 1
    %16 = vsyncpa %s15, 0
    %17 = vsyncpa [#allocation5], 0
    %s18 = scalar_lea.sflag [#allocation5], 1
    %19 = vsyncpa %s18, 0
    loop: start=0, step=1, limit=4
    $region2: #{tpu_custom_call.1} parent=1 // loop_pre_header
      _
    $region3: #{tpu_custom_call.1} parent=1 // loop_header
      %s21 = sphi 0, %s25
      %p22 = scmp.ge.s32.totalorder %s21, 4
      %s28 = sphi 0, %s40
      %s29 = sphi 0, %s36
      %s30 = sphi 0, %s28
      %s31 = sphi 0, %s29
      %s32 = sphi 0, %s30
      %s33 = sphi 0, %s31
      %s45 = sphi 0, %s47
      %s48 = sphi 0, %s45
      %s49 = sphi 0, %s48
      %s65 = sphi 0, %s49
      %s69 = sphi 0, %s69
      %s71 = sphi 0, %s69
      %s72 = sphi 0, %s71
      %s86 = sphi 0, %s72
      %s90 = sphi 0, %s90
      %s92 = sphi 0, %s90
      %s93 = sphi 0, %s92
      %s107 = sphi 0, %s93
      %s111 = sphi 0, %s111
      %s113 = sphi 0, %s111
      %s114 = sphi 0, %s113
      %s128 = sphi 0, %s114
      %s134 = sphi 0, %s136
      %s137 = sphi 0, %s134
      %s138 = sphi 0, %s137
      %s154 = sphi 0, %s138
      %s158 = sphi 0, %s158
      %s160 = sphi 0, %s158
      %s161 = sphi 0, %s160
      %s175 = sphi 0, %s161
      %s179 = sphi 0, %s179
      %s181 = sphi 0, %s179
      %s182 = sphi 0, %s181
      %s196 = sphi 0, %s182
      %s200 = sphi 0, %s200
      %s202 = sphi 0, %s200
      %s203 = sphi 0, %s202
      %s217 = sphi 0, %s203
      %s221 = sphi 0, %s221
      %s223 = sphi 0, %s221
      %s224 = sphi 0, %s223
      %s238 = sphi 0, %s224
      %s244 = sphi 0, %s246
      %s247 = sphi 0, %s244
      %s248 = sphi 0, %s247
      %s264 = sphi 0, %s248
    $region4: #{tpu_custom_call.1} parent=1 // loop_header_branch
      %24 = sbr.rel (%p22) target = $region8
    $region5: #{tpu_custom_call.1} parent=1 // loop_body
      %s26 = ssub.s32 %s21, 1
      %s27 = ssub.s32 %s21, 2
      %s34 = sadd.s32 1, %s29
      %p35 = scmp.ge.s32.totalorder %s34, 1
      %s36 = scalar_select %p35, 0, %s34
      %s37 = sadd.s32 1, %s28
      %s38 = scalar_select %p35, %s37, %s28
      %p39 = scmp.ge.s32.totalorder %s38, 2
      %s40 = scalar_select %p39, 0, %s38
      %s41 = ssub.s32 %s28, %s40
      %s42 = ssub.s32 %s29, %s36
      %s43 = sor.u32 %s41, %s42
      %p44 = scmp.eq.s32.totalorder %s43, 0
      %s46 = sadd.s32 %s45, 1
      %s47 = scalar_select %p44, %s45, %s46
      %p50 = pneg %p44
      %p51 = scmp.eq.s32.totalorder %s21, 1
      %p52 = por %p50, %p51
      %p53 = scmp.ne.s32.totalorder %s45, %s48
      %p54 = scmp.eq.s32.totalorder %s21, 0
      %p55 = por %p53, %p54
      %p56 = scmp.ne.s32.totalorder %s45, %s48
      %p57 = scmp.eq.s32.totalorder %s26, 1
      %p58 = por %p56, %p57
      %p59 = scmp.ne.s32.totalorder %s48, %s49
      %p60 = scmp.eq.s32.totalorder %s26, 0
      %p61 = por %p59, %p60
      %p62 = scmp.ne.s32.totalorder %s48, %s49
      %p63 = scmp.eq.s32.totalorder %s27, 1
      %p64 = por %p62, %p63
      %p66 = scmp.ne.s32.totalorder %s49, %s65
      %p67 = scmp.eq.s32.totalorder %s27, 0
      %p68 = por %p66, %p67
      %s70 = sadd.s32 %s69, 1
      %p73 = scmp.eq.s32.totalorder %s21, 1
      %p74 = scmp.ne.s32.totalorder %s69, %s71
      %p75 = scmp.eq.s32.totalorder %s21, 0
      %p76 = por %p74, %p75
      %p77 = scmp.ne.s32.totalorder %s69, %s71
      %p78 = scmp.eq.s32.totalorder %s26, 1
      %p79 = por %p77, %p78
      %p80 = scmp.ne.s32.totalorder %s71, %s72
      %p81 = scmp.eq.s32.totalorder %s26, 0
      %p82 = por %p80, %p81
      %p83 = scmp.ne.s32.totalorder %s71, %s72
      %p84 = scmp.eq.s32.totalorder %s27, 1
      %p85 = por %p83, %p84
      %p87 = scmp.ne.s32.totalorder %s72, %s86
      %p88 = scmp.eq.s32.totalorder %s27, 0
      %p89 = por %p87, %p88
      %s91 = sadd.s32 %s90, 1
      %p94 = scmp.eq.s32.totalorder %s21, 1
      %p95 = scmp.ne.s32.totalorder %s90, %s92
      %p96 = scmp.eq.s32.totalorder %s21, 0
      %p97 = por %p95, %p96
      %p98 = scmp.ne.s32.totalorder %s90, %s92
      %p99 = scmp.eq.s32.totalorder %s26, 1
      %p100 = por %p98, %p99
      %p101 = scmp.ne.s32.totalorder %s92, %s93
      %p102 = scmp.eq.s32.totalorder %s26, 0
      %p103 = por %p101, %p102
      %p104 = scmp.ne.s32.totalorder %s92, %s93
      %p105 = scmp.eq.s32.totalorder %s27, 1
      %p106 = por %p104, %p105
      %p108 = scmp.ne.s32.totalorder %s93, %s107
      %p109 = scmp.eq.s32.totalorder %s27, 0
      %p110 = por %p108, %p109
      %s112 = sadd.s32 %s111, 1
      %p115 = scmp.eq.s32.totalorder %s21, 1
      %p116 = scmp.ne.s32.totalorder %s111, %s113
      %p117 = scmp.eq.s32.totalorder %s21, 0
      %p118 = por %p116, %p117
      %p119 = scmp.ne.s32.totalorder %s111, %s113
      %p120 = scmp.eq.s32.totalorder %s26, 1
      %p121 = por %p119, %p120
      %p122 = scmp.ne.s32.totalorder %s113, %s114
      %p123 = scmp.eq.s32.totalorder %s26, 0
      %p124 = por %p122, %p123
      %p125 = scmp.ne.s32.totalorder %s113, %s114
      %p126 = scmp.eq.s32.totalorder %s27, 1
      %p127 = por %p125, %p126
      %p129 = scmp.ne.s32.totalorder %s114, %s128
      %p130 = scmp.eq.s32.totalorder %s27, 0
      %p131 = por %p129, %p130
      %s132 = ssub.s32 %s28, %s40
      %p133 = scmp.eq.s32.totalorder %s132, 0
      %s135 = sadd.s32 %s134, 1
      %s136 = scalar_select %p133, %s134, %s135
      %p139 = pneg %p133
      %p140 = scmp.eq.s32.totalorder %s21, 1
      %p141 = por %p139, %p140
      %p142 = scmp.ne.s32.totalorder %s134, %s137
      %p143 = scmp.eq.s32.totalorder %s21, 0
      %p144 = por %p142, %p143
      %p145 = scmp.ne.s32.totalorder %s134, %s137
      %p146 = scmp.eq.s32.totalorder %s26, 1
      %p147 = por %p145, %p146
      %p148 = scmp.ne.s32.totalorder %s137, %s138
      %p149 = scmp.eq.s32.totalorder %s26, 0
      %p150 = por %p148, %p149
      %p151 = scmp.ne.s32.totalorder %s137, %s138
      %p152 = scmp.eq.s32.totalorder %s27, 1
      %p153 = por %p151, %p152
      %p155 = scmp.ne.s32.totalorder %s138, %s154
      %p156 = scmp.eq.s32.totalorder %s27, 0
      %p157 = por %p155, %p156
      %s159 = sadd.s32 %s158, 1
      %p162 = scmp.eq.s32.totalorder %s21, 1
      %p163 = scmp.ne.s32.totalorder %s158, %s160
      %p164 = scmp.eq.s32.totalorder %s21, 0
      %p165 = por %p163, %p164
      %p166 = scmp.ne.s32.totalorder %s158, %s160
      %p167 = scmp.eq.s32.totalorder %s26, 1
      %p168 = por %p166, %p167
      %p169 = scmp.ne.s32.totalorder %s160, %s161
      %p170 = scmp.eq.s32.totalorder %s26, 0
      %p171 = por %p169, %p170
      %p172 = scmp.ne.s32.totalorder %s160, %s161
      %p173 = scmp.eq.s32.totalorder %s27, 1
      %p174 = por %p172, %p173
      %p176 = scmp.ne.s32.totalorder %s161, %s175
      %p177 = scmp.eq.s32.totalorder %s27, 0
      %p178 = por %p176, %p177
      %s180 = sadd.s32 %s179, 1
      %p183 = scmp.eq.s32.totalorder %s21, 1
      %p184 = scmp.ne.s32.totalorder %s179, %s181
      %p185 = scmp.eq.s32.totalorder %s21, 0
      %p186 = por %p184, %p185
      %p187 = scmp.ne.s32.totalorder %s179, %s181
      %p188 = scmp.eq.s32.totalorder %s26, 1
      %p189 = por %p187, %p188
      %p190 = scmp.ne.s32.totalorder %s181, %s182
      %p191 = scmp.eq.s32.totalorder %s26, 0
      %p192 = por %p190, %p191
      %p193 = scmp.ne.s32.totalorder %s181, %s182
      %p194 = scmp.eq.s32.totalorder %s27, 1
      %p195 = por %p193, %p194
      %p197 = scmp.ne.s32.totalorder %s182, %s196
      %p198 = scmp.eq.s32.totalorder %s27, 0
      %p199 = por %p197, %p198
      %s201 = sadd.s32 %s200, 1
      %p204 = scmp.eq.s32.totalorder %s21, 1
      %p205 = scmp.ne.s32.totalorder %s200, %s202
      %p206 = scmp.eq.s32.totalorder %s21, 0
      %p207 = por %p205, %p206
      %p208 = scmp.ne.s32.totalorder %s200, %s202
      %p209 = scmp.eq.s32.totalorder %s26, 1
      %p210 = por %p208, %p209
      %p211 = scmp.ne.s32.totalorder %s202, %s203
      %p212 = scmp.eq.s32.totalorder %s26, 0
      %p213 = por %p211, %p212
      %p214 = scmp.ne.s32.totalorder %s202, %s203
      %p215 = scmp.eq.s32.totalorder %s27, 1
      %p216 = por %p214, %p215
      %p218 = scmp.ne.s32.totalorder %s203, %s217
      %p219 = scmp.eq.s32.totalorder %s27, 0
      %p220 = por %p218, %p219
      %s222 = sadd.s32 %s221, 1
      %p225 = scmp.eq.s32.totalorder %s21, 1
      %p226 = scmp.ne.s32.totalorder %s221, %s223
      %p227 = scmp.eq.s32.totalorder %s21, 0
      %p228 = por %p226, %p227
      %p229 = scmp.ne.s32.totalorder %s221, %s223
      %p230 = scmp.eq.s32.totalorder %s26, 1
      %p231 = por %p229, %p230
      %p232 = scmp.ne.s32.totalorder %s223, %s224
      %p233 = scmp.eq.s32.totalorder %s26, 0
      %p234 = por %p232, %p233
      %p235 = scmp.ne.s32.totalorder %s223, %s224
      %p236 = scmp.eq.s32.totalorder %s27, 1
      %p237 = por %p235, %p236
      %p239 = scmp.ne.s32.totalorder %s224, %s238
      %p240 = scmp.eq.s32.totalorder %s27, 0
      %p241 = por %p239, %p240
      %s242 = ssub.s32 %s28, %s40
      %p243 = scmp.eq.s32.totalorder %s242, 0
      %s245 = sadd.s32 %s244, 1
      %s246 = scalar_select %p243, %s244, %s245
      %p249 = pneg %p243
      %p250 = scmp.eq.s32.totalorder %s21, 1
      %p251 = por %p249, %p250
      %p252 = scmp.ne.s32.totalorder %s244, %s247
      %p253 = scmp.eq.s32.totalorder %s21, 0
      %p254 = por %p252, %p253
      %p255 = scmp.ne.s32.totalorder %s244, %s247
      %p256 = scmp.eq.s32.totalorder %s26, 1
      %p257 = por %p255, %p256
      %p258 = scmp.ne.s32.totalorder %s247, %s248
      %p259 = scmp.eq.s32.totalorder %s26, 0
      %p260 = por %p258, %p259
      %p261 = scmp.ne.s32.totalorder %s247, %s248
      %p262 = scmp.eq.s32.totalorder %s27, 1
      %p263 = por %p261, %p262
      %p265 = scmp.ne.s32.totalorder %s248, %s264
      %p266 = scmp.eq.s32.totalorder %s27, 0
      %p267 = por %p265, %p266
      %p268 = scmp.le.s32.totalorder 1, %s21
      %p269 = scmp.lt.s32.totalorder %s21, 3
      %p270 = pnand %p268, %p269
      %p271 = pneg %p270
      // Predicated region
      $region9: #{tpu_custom_call.1} parent=5 // pred_check
        _
      $region10: #{tpu_custom_call.1} parent=5 // pred_check_branch
        %273 = sbr.rel (%p270) target = $region12
      $region11: #{tpu_custom_call.1} parent=5 // pred_region
        %s274 = ssub.s32 %s21, 1
        // Predicated region
        $region13: #{tpu_custom_call.1} parent=11 // pred_check
          %p275 = pneg %p82
        $region14: #{tpu_custom_call.1} parent=11 // pred_check_branch
          %277 = sbr.rel (%p275) target = $region16
        $region15: #{tpu_custom_call.1} parent=11 // pred_region
          _
        $region16: #{tpu_custom_call.1} parent=11 // pred_fallthru
          _
        // Predicated region
        $region17: #{tpu_custom_call.1} parent=11 // pred_check
          %p278 = pneg %p103
        $region18: #{tpu_custom_call.1} parent=11 // pred_check_branch
          %280 = sbr.rel (%p278) target = $region20
        $region19: #{tpu_custom_call.1} parent=11 // pred_region
          _
        $region20: #{tpu_custom_call.1} parent=11 // pred_fallthru
          _
        // Predicated region
        $region21: #{tpu_custom_call.1} parent=11 // pred_check
          %p281 = pneg %p124
        $region22: #{tpu_custom_call.1} parent=11 // pred_check_branch
          %283 = sbr.rel (%p281) target = $region24
        $region23: #{tpu_custom_call.1} parent=11 // pred_region
          _
        $region24: #{tpu_custom_call.1} parent=11 // pred_fallthru
          _
        // Predicated region
        $region25: #{tpu_custom_call.1} parent=11 // pred_check
          %p284 = pneg %p171
        $region26: #{tpu_custom_call.1} parent=11 // pred_check_branch
          %286 = sbr.rel (%p284) target = $region28
        $region27: #{tpu_custom_call.1} parent=11 // pred_region
          _
        $region28: #{tpu_custom_call.1} parent=11 // pred_fallthru
          _
        // Predicated region
        $region29: #{tpu_custom_call.1} parent=11 // pred_check
          %p287 = pneg %p192
        $region30: #{tpu_custom_call.1} parent=11 // pred_check_branch
          %289 = sbr.rel (%p287) target = $region32
        $region31: #{tpu_custom_call.1} parent=11 // pred_region
          _
        $region32: #{tpu_custom_call.1} parent=11 // pred_fallthru
          _
        // Predicated region
        $region33: #{tpu_custom_call.1} parent=11 // pred_check
          %p290 = pneg %p213
        $region34: #{tpu_custom_call.1} parent=11 // pred_check_branch
          %292 = sbr.rel (%p290) target = $region36
        $region35: #{tpu_custom_call.1} parent=11 // pred_region
          _
        $region36: #{tpu_custom_call.1} parent=11 // pred_fallthru
          _
        // Predicated region
        $region37: #{tpu_custom_call.1} parent=11 // pred_check
          %p293 = pneg %p234
        $region38: #{tpu_custom_call.1} parent=11 // pred_check_branch
          %295 = sbr.rel (%p293) target = $region40
        $region39: #{tpu_custom_call.1} parent=11 // pred_region
          _
        $region40: #{tpu_custom_call.1} parent=11 // pred_fallthru
          _
      $region12: #{tpu_custom_call.1} parent=5 // pred_fallthru
        _
      %p296 = scmp.lt.s32.totalorder %s21, 2
      // Predicated region
      $region41: #{tpu_custom_call.1} parent=5 // pred_check
        %p297 = pneg %p296
      $region42: #{tpu_custom_call.1} parent=5 // pred_check_branch
        %299 = sbr.rel (%p297) target = $region44
      $region43: #{tpu_custom_call.1} parent=5 // pred_region
        // Predicated region
        $region45: #{tpu_custom_call.1} parent=43 // pred_check
          %p300 = pneg %p55
        $region46: #{tpu_custom_call.1} parent=43 // pred_check_branch
          %302 = sbr.rel (%p300) target = $region48
        $region47: #{tpu_custom_call.1} parent=43 // pred_region
          %s303 = sand.u32 %s45, 1
          %s304 = scalar_lea.sflag [#allocation4], %s303
          %s305 = sand.u32 %s45, 1
          %s306 = smul.addr %s305, 512
          %s307 = scalar_lea.vmem [#allocation3], %s306
          %s308 = smul.u32 32, %s28
          %s309 = smul.u32 4, %s29
          %s311 = ssub.s32 8192, 8192
          %312 = vsyncadd %s304, %s311
          %s313 = smul.addr %s308, 4
          %s314 = sadd.s32 %s309, %s313
          %s315 = smul.addr %s314, 64
          %s316 = scalar_lea.hbm %s0, %s315
          %s317 = sshll.u32 %s307, 4
          %s318 = int_to_ptr.vmem [resolvable:$true] %s317
          %323 = dma.hbm_to_vmem [thread:$0]  %s316, 8192, %s318, %s304, 256, 256, 16
        $region48: #{tpu_custom_call.1} parent=43 // pred_fallthru
          _
        // Predicated region
        $region49: #{tpu_custom_call.1} parent=43 // pred_check
          %p324 = pneg %p144
        $region50: #{tpu_custom_call.1} parent=43 // pred_check_branch
          %326 = sbr.rel (%p324) target = $region52
        $region51: #{tpu_custom_call.1} parent=43 // pred_region
          %s327 = smul.u32 32, %s28
          %p328 = scmp.lt.s32.totalorder %s327, 63
          %s329 = scalar_select %p328, %s327, 63
          %s330 = smul.addr %s329, 8
          %s331 = scalar_lea.vmem %s4, %s330
          %s332 = smul.u32 32, %s28
        $region52: #{tpu_custom_call.1} parent=43 // pred_fallthru
          _
      $region44: #{tpu_custom_call.1} parent=5 // pred_fallthru
        _
      %p333 = scmp.le.s32.totalorder 1, %s21
      %p334 = scmp.lt.s32.totalorder %s21, 3
      %p335 = pnand %p333, %p334
      %p336 = pneg %p335
      // Predicated region
      $region53: #{tpu_custom_call.1} parent=5 // pred_check
        _
      $region54: #{tpu_custom_call.1} parent=5 // pred_check_branch
        %338 = sbr.rel (%p335) target = $region56
      $region55: #{tpu_custom_call.1} parent=5 // pred_region
        %s339 = ssub.s32 %s21, 1
        %s340 = sand.u32 %s48, 1
        %s341 = scalar_lea.sflag [#allocation4], %s340
        %s342 = sand.u32 %s48, 1
        %s343 = smul.addr %s342, 512
        %s344 = scalar_lea.vmem [#allocation3], %s343
        // Predicated region
        $region57: #{tpu_custom_call.1} parent=55 // pred_check
          %p345 = pneg %p61
        $region58: #{tpu_custom_call.1} parent=55 // pred_check_branch
          %347 = sbr.rel (%p345) target = $region60
        $region59: #{tpu_custom_call.1} parent=55 // pred_region
          %348 = dma.done %s341, 8192
        $region60: #{tpu_custom_call.1} parent=55 // pred_fallthru
          _
        %s349 = sand.u32 %s48, 1
        %s350 = scalar_lea.sflag [#allocation4], %s349
        %s351 = sand.u32 %s48, 1
        %s352 = smul.addr %s351, 512
        %s353 = scalar_lea.vmem [#allocation3], %s352
        %p354 = pneg %p61
        %p355 = pneg %p58
        %p356 = pneg %p82
        %p357 = pneg %p79
        %p358 = pneg %p103
        %p359 = pneg %p100
        %p360 = pneg %p124
        %p361 = pneg %p121
        %s362 = smul.u32 32, %s30
        %p363 = scmp.lt.s32.totalorder %s362, 63
        %s364 = scalar_select %p363, %s362, 63
        %s365 = smul.addr %s364, 8
        %s366 = scalar_lea.vmem %s4, %s365
        %p367 = pneg %p150
        %p368 = pneg %p147
        %p369 = pneg %p171
        %p370 = pneg %p168
        %p371 = pneg %p192
        %p372 = pneg %p189
        %p373 = pneg %p213
        %p374 = pneg %p210
        %p375 = pneg %p234
        %p376 = pneg %p231
        %p377 = pneg %p260
        %p378 = pneg %p257
        %s379 = sand.u32 %s247, 1
        %s380 = scalar_lea.sflag [#allocation5], %s379
        %s381 = sand.u32 %s247, 1
        %s382 = smul.addr %s381, 256
        %s383 = scalar_lea.vmem [#allocation6], %s382
        %s384 = smul.u32 32, %s30
        %s385 = smul.u32 4, %s31
        %s386 = smul.u32 32, %s30
        %p387 = scmp.lt.s32.totalorder %s386, 63
        %s388 = scalar_select %p387, %s386, 63
        %s389 = smul.addr %s388, 8
        %s390 = scalar_lea.vmem %s4, %s389
        %s391 = smul.u32 32, %s30
        %s392 = smul.u32 32, %s30
        %p394 = scmp.eq.s32.totalorder %s31, 0
        // Predicated region
        $region61: #{tpu_custom_call.1} parent=55 // pred_check
          %p395 = pneg %p394
        $region62: #{tpu_custom_call.1} parent=55 // pred_check_branch
          %397 = sbr.rel (%p395) target = $region64
        $region63: #{tpu_custom_call.1} parent=55 // pred_region
          %398 = vst [vmem:[#allocation2] sm:$0xff] 0.0
          %399 = vst [vmem:[#allocation2 + $0x8] sm:$0xff] 0.0
          %400 = vst [vmem:[#allocation2 + $0x10] sm:$0xff] 0.0
          %401 = vst [vmem:[#allocation2 + $0x18] sm:$0xff] 0.0
          %402 = vst [vmem:[#allocation2 + $0x20] sm:$0xff] 0.0
          %403 = vst [vmem:[#allocation2 + $0x28] sm:$0xff] 0.0
          %404 = vst [vmem:[#allocation2 + $0x30] sm:$0xff] 0.0
          %405 = vst [vmem:[#allocation2 + $0x38] sm:$0xff] 0.0
          %406 = vst [vmem:[#allocation2 + $0x40] sm:$0xff] 0.0
          %407 = vst [vmem:[#allocation2 + $0x48] sm:$0xff] 0.0
          %408 = vst [vmem:[#allocation2 + $0x50] sm:$0xff] 0.0
          %409 = vst [vmem:[#allocation2 + $0x58] sm:$0xff] 0.0
          %410 = vst [vmem:[#allocation2 + $0x60] sm:$0xff] 0.0
          %411 = vst [vmem:[#allocation2 + $0x68] sm:$0xff] 0.0
          %412 = vst [vmem:[#allocation2 + $0x70] sm:$0xff] 0.0
          %413 = vst [vmem:[#allocation2 + $0x78] sm:$0xff] 0.0
          %414 = vst [vmem:[#allocation2 + $0x80] sm:$0xff] 0.0
          %415 = vst [vmem:[#allocation2 + $0x88] sm:$0xff] 0.0
          %416 = vst [vmem:[#allocation2 + $0x90] sm:$0xff] 0.0
          %417 = vst [vmem:[#allocation2 + $0x98] sm:$0xff] 0.0
          %418 = vst [vmem:[#allocation2 + $0xa0] sm:$0xff] 0.0
          %419 = vst [vmem:[#allocation2 + $0xa8] sm:$0xff] 0.0
          %420 = vst [vmem:[#allocation2 + $0xb0] sm:$0xff] 0.0
          %421 = vst [vmem:[#allocation2 + $0xb8] sm:$0xff] 0.0
          %422 = vst [vmem:[#allocation2 + $0xc0] sm:$0xff] 0.0
          %423 = vst [vmem:[#allocation2 + $0xc8] sm:$0xff] 0.0
          %424 = vst [vmem:[#allocation2 + $0xd0] sm:$0xff] 0.0
          %425 = vst [vmem:[#allocation2 + $0xd8] sm:$0xff] 0.0
          %426 = vst [vmem:[#allocation2 + $0xe0] sm:$0xff] 0.0
          %427 = vst [vmem:[#allocation2 + $0xe8] sm:$0xff] 0.0
          %428 = vst [vmem:[#allocation2 + $0xf0] sm:$0xff] 0.0
          %429 = vst [vmem:[#allocation2 + $0xf8] sm:$0xff] 0.0
        $region64: #{tpu_custom_call.1} parent=55 // pred_fallthru
          _
        %s430 = smul.u32 %s31, 512
        %s431 = sshra.s32 %s430, 3
        %s432 = sand.u32 %s430, 7
        %s433 = smul.addr %s431, 4
        %s434 = scalar_lea.vmem %s1, %s433
        %v435 = vld [vmem:[%s434] sm:$0xf]
        %v436 = vld [vmem:[%s434 + $0x4] sm:$0xf]
        %v437 = vld [vmem:[%s434 + $0x8] sm:$0xf]
        %v438 = vld [vmem:[%s434 + $0xc] sm:$0xf]
        %v439 = vld [vmem:[%s434 + $0x10] sm:$0xf]
        %v440 = vld [vmem:[%s434 + $0x14] sm:$0xf]
        %v441 = vld [vmem:[%s434 + $0x18] sm:$0xf]
        %v442 = vld [vmem:[%s434 + $0x1c] sm:$0xf]
        %v443 = vld [vmem:[%s434 + $0x20] sm:$0xf]
        %v444 = vld [vmem:[%s434 + $0x24] sm:$0xf]
        %v445 = vld [vmem:[%s434 + $0x28] sm:$0xf]
        %v446 = vld [vmem:[%s434 + $0x2c] sm:$0xf]
        %v447 = vld [vmem:[%s434 + $0x30] sm:$0xf]
        %v448 = vld [vmem:[%s434 + $0x34] sm:$0xf]
        %v449 = vld [vmem:[%s434 + $0x38] sm:$0xf]
        %v450 = vld [vmem:[%s434 + $0x3c] sm:$0xf]
        %v451 = vld [vmem:[%s434 + $0x40] sm:$0xf]
        %v452 = vld [vmem:[%s434 + $0x44] sm:$0xf]
        %v453 = vld [vmem:[%s434 + $0x48] sm:$0xf]
        %v454 = vld [vmem:[%s434 + $0x4c] sm:$0xf]
        %v455 = vld [vmem:[%s434 + $0x50] sm:$0xf]
        %v456 = vld [vmem:[%s434 + $0x54] sm:$0xf]
        %v457 = vld [vmem:[%s434 + $0x58] sm:$0xf]
        %v458 = vld [vmem:[%s434 + $0x5c] sm:$0xf]
        %v459 = vld [vmem:[%s434 + $0x60] sm:$0xf]
        %v460 = vld [vmem:[%s434 + $0x64] sm:$0xf]
        %v461 = vld [vmem:[%s434 + $0x68] sm:$0xf]
        %v462 = vld [vmem:[%s434 + $0x6c] sm:$0xf]
        %v463 = vld [vmem:[%s434 + $0x70] sm:$0xf]
        %v464 = vld [vmem:[%s434 + $0x74] sm:$0xf]
        %v465 = vld [vmem:[%s434 + $0x78] sm:$0xf]
        %v466 = vld [vmem:[%s434 + $0x7c] sm:$0xf]
        %v467 = vld [vmem:[%s434 + $0x80] sm:$0xf]
        %v468 = vld [vmem:[%s434 + $0x84] sm:$0xf]
        %v469 = vld [vmem:[%s434 + $0x88] sm:$0xf]
        %v470 = vld [vmem:[%s434 + $0x8c] sm:$0xf]
        %v471 = vld [vmem:[%s434 + $0x90] sm:$0xf]
        %v472 = vld [vmem:[%s434 + $0x94] sm:$0xf]
        %v473 = vld [vmem:[%s434 + $0x98] sm:$0xf]
        %v474 = vld [vmem:[%s434 + $0x9c] sm:$0xf]
        %v475 = vld [vmem:[%s434 + $0xa0] sm:$0xf]
        %v476 = vld [vmem:[%s434 + $0xa4] sm:$0xf]
        %v477 = vld [vmem:[%s434 + $0xa8] sm:$0xf]
        %v478 = vld [vmem:[%s434 + $0xac] sm:$0xf]
        %v479 = vld [vmem:[%s434 + $0xb0] sm:$0xf]
        %v480 = vld [vmem:[%s434 + $0xb4] sm:$0xf]
        %v481 = vld [vmem:[%s434 + $0xb8] sm:$0xf]
        %v482 = vld [vmem:[%s434 + $0xbc] sm:$0xf]
        %v483 = vld [vmem:[%s434 + $0xc0] sm:$0xf]
        %v484 = vld [vmem:[%s434 + $0xc4] sm:$0xf]
        %v485 = vld [vmem:[%s434 + $0xc8] sm:$0xf]
        %v486 = vld [vmem:[%s434 + $0xcc] sm:$0xf]
        %v487 = vld [vmem:[%s434 + $0xd0] sm:$0xf]
        %v488 = vld [vmem:[%s434 + $0xd4] sm:$0xf]
        %v489 = vld [vmem:[%s434 + $0xd8] sm:$0xf]
        %v490 = vld [vmem:[%s434 + $0xdc] sm:$0xf]
        %v491 = vld [vmem:[%s434 + $0xe0] sm:$0xf]
        %v492 = vld [vmem:[%s434 + $0xe4] sm:$0xf]
        %v493 = vld [vmem:[%s434 + $0xe8] sm:$0xf]
        %v494 = vld [vmem:[%s434 + $0xec] sm:$0xf]
        %v495 = vld [vmem:[%s434 + $0xf0] sm:$0xf]
        %v496 = vld [vmem:[%s434 + $0xf4] sm:$0xf]
        %v497 = vld [vmem:[%s434 + $0xf8] sm:$0xf]
        %v498 = vld [vmem:[%s434 + $0xfc] sm:$0xf]
        %v499 = vld [vmem:[#allocation2] sm:$0xff]
        %v500 = vld [vmem:[#allocation2 + $0x8] sm:$0xff]
        %v501 = vld [vmem:[#allocation2 + $0x10] sm:$0xff]
        %v502 = vld [vmem:[#allocation2 + $0x18] sm:$0xff]
        %v503 = vld [vmem:[#allocation2 + $0x20] sm:$0xff]
        %v504 = vld [vmem:[#allocation2 + $0x28] sm:$0xff]
        %v505 = vld [vmem:[#allocation2 + $0x30] sm:$0xff]
        %v506 = vld [vmem:[#allocation2 + $0x38] sm:$0xff]
        %v507 = vld [vmem:[#allocation2 + $0x40] sm:$0xff]
        %v508 = vld [vmem:[#allocation2 + $0x48] sm:$0xff]
        %v509 = vld [vmem:[#allocation2 + $0x50] sm:$0xff]
        %v510 = vld [vmem:[#allocation2 + $0x58] sm:$0xff]
        %v511 = vld [vmem:[#allocation2 + $0x60] sm:$0xff]
        %v512 = vld [vmem:[#allocation2 + $0x68] sm:$0xff]
        %v513 = vld [vmem:[#allocation2 + $0x70] sm:$0xff]
        %v514 = vld [vmem:[#allocation2 + $0x78] sm:$0xff]
        %v515 = vld [vmem:[#allocation2 + $0x80] sm:$0xff]
        %v516 = vld [vmem:[#allocation2 + $0x88] sm:$0xff]
        %v517 = vld [vmem:[#allocation2 + $0x90] sm:$0xff]
        %v518 = vld [vmem:[#allocation2 + $0x98] sm:$0xff]
        %v519 = vld [vmem:[#allocation2 + $0xa0] sm:$0xff]
        %v520 = vld [vmem:[#allocation2 + $0xa8] sm:$0xff]
        %v521 = vld [vmem:[#allocation2 + $0xb0] sm:$0xff]
        %v522 = vld [vmem:[#allocation2 + $0xb8] sm:$0xff]
        %v523 = vld [vmem:[#allocation2 + $0xc0] sm:$0xff]
        %v524 = vld [vmem:[#allocation2 + $0xc8] sm:$0xff]
        %v525 = vld [vmem:[#allocation2 + $0xd0] sm:$0xff]
        %v526 = vld [vmem:[#allocation2 + $0xd8] sm:$0xff]
        %v527 = vld [vmem:[#allocation2 + $0xe0] sm:$0xff]
        %v528 = vld [vmem:[#allocation2 + $0xe8] sm:$0xff]
        %v529 = vld [vmem:[#allocation2 + $0xf0] sm:$0xff]
        %v530 = vld [vmem:[#allocation2 + $0xf8] sm:$0xff]
        %v531 = vld [vmem:[%s344] sm:$0xff]
        %v532 = vld [vmem:[%s344 + $0x8] sm:$0xff]
        %v533 = vld [vmem:[%s344 + $0x10] sm:$0xff]
        %v534 = vld [vmem:[%s344 + $0x18] sm:$0xff]
        %v535 = vld [vmem:[%s344 + $0x20] sm:$0xff]
        %v536 = vld [vmem:[%s344 + $0x28] sm:$0xff]
        %v537 = vld [vmem:[%s344 + $0x30] sm:$0xff]
        %v538 = vld [vmem:[%s344 + $0x38] sm:$0xff]
        %v539 = vld [vmem:[%s344 + $0x40] sm:$0xff]
        %v540 = vld [vmem:[%s344 + $0x48] sm:$0xff]
        %v541 = vld [vmem:[%s344 + $0x50] sm:$0xff]
        %v542 = vld [vmem:[%s344 + $0x58] sm:$0xff]
        %v543 = vld [vmem:[%s344 + $0x60] sm:$0xff]
        %v544 = vld [vmem:[%s344 + $0x68] sm:$0xff]
        %v545 = vld [vmem:[%s344 + $0x70] sm:$0xff]
        %v546 = vld [vmem:[%s344 + $0x78] sm:$0xff]
        %v547 = vld [vmem:[%s344 + $0x80] sm:$0xff]
        %v548 = vld [vmem:[%s344 + $0x88] sm:$0xff]
        %v549 = vld [vmem:[%s344 + $0x90] sm:$0xff]
        %v550 = vld [vmem:[%s344 + $0x98] sm:$0xff]
        %v551 = vld [vmem:[%s344 + $0xa0] sm:$0xff]
        %v552 = vld [vmem:[%s344 + $0xa8] sm:$0xff]
        %v553 = vld [vmem:[%s344 + $0xb0] sm:$0xff]
        %v554 = vld [vmem:[%s344 + $0xb8] sm:$0xff]
        %v555 = vld [vmem:[%s344 + $0xc0] sm:$0xff]
        %v556 = vld [vmem:[%s344 + $0xc8] sm:$0xff]
        %v557 = vld [vmem:[%s344 + $0xd0] sm:$0xff]
        %v558 = vld [vmem:[%s344 + $0xd8] sm:$0xff]
        %v559 = vld [vmem:[%s344 + $0xe0] sm:$0xff]
        %v560 = vld [vmem:[%s344 + $0xe8] sm:$0xff]
        %v561 = vld [vmem:[%s344 + $0xf0] sm:$0xff]
        %v562 = vld [vmem:[%s344 + $0xf8] sm:$0xff]
        %v563 = vld [vmem:[%s344 + $0x100] sm:$0xff]
        %v564 = vld [vmem:[%s344 + $0x108] sm:$0xff]
        %v565 = vld [vmem:[%s344 + $0x110] sm:$0xff]
        %v566 = vld [vmem:[%s344 + $0x118] sm:$0xff]
        %v567 = vld [vmem:[%s344 + $0x120] sm:$0xff]
        %v568 = vld [vmem:[%s344 + $0x128] sm:$0xff]
        %v569 = vld [vmem:[%s344 + $0x130] sm:$0xff]
        %v570 = vld [vmem:[%s344 + $0x138] sm:$0xff]
        %v571 = vld [vmem:[%s344 + $0x140] sm:$0xff]
        %v572 = vld [vmem:[%s344 + $0x148] sm:$0xff]
        %v573 = vld [vmem:[%s344 + $0x150] sm:$0xff]
        %v574 = vld [vmem:[%s344 + $0x158] sm:$0xff]
        %v575 = vld [vmem:[%s344 + $0x160] sm:$0xff]
        %v576 = vld [vmem:[%s344 + $0x168] sm:$0xff]
        %v577 = vld [vmem:[%s344 + $0x170] sm:$0xff]
        %v578 = vld [vmem:[%s344 + $0x178] sm:$0xff]
        %v579 = vld [vmem:[%s344 + $0x180] sm:$0xff]
        %v580 = vld [vmem:[%s344 + $0x188] sm:$0xff]
        %v581 = vld [vmem:[%s344 + $0x190] sm:$0xff]
        %v582 = vld [vmem:[%s344 + $0x198] sm:$0xff]
        %v583 = vld [vmem:[%s344 + $0x1a0] sm:$0xff]
        %v584 = vld [vmem:[%s344 + $0x1a8] sm:$0xff]
        %v585 = vld [vmem:[%s344 + $0x1b0] sm:$0xff]
        %v586 = vld [vmem:[%s344 + $0x1b8] sm:$0xff]
        %v587 = vld [vmem:[%s344 + $0x1c0] sm:$0xff]
        %v588 = vld [vmem:[%s344 + $0x1c8] sm:$0xff]
        %v589 = vld [vmem:[%s344 + $0x1d0] sm:$0xff]
        %v590 = vld [vmem:[%s344 + $0x1d8] sm:$0xff]
        %v591 = vld [vmem:[%s344 + $0x1e0] sm:$0xff]
        %v592 = vld [vmem:[%s344 + $0x1e8] sm:$0xff]
        %v593 = vld [vmem:[%s344 + $0x1f0] sm:$0xff]
        %v594 = vld [vmem:[%s344 + $0x1f8] sm:$0xff]
        %v659 = vunpack.c.l.b16 %v531
        %v660 = vunpack.c.h.b16 %v531
        %v661 = vunpack.c.l.b16 %v532
        %v662 = vunpack.c.h.b16 %v532
        %v663 = vunpack.c.l.b16 %v533
        %v664 = vunpack.c.h.b16 %v533
        %v665 = vunpack.c.l.b16 %v534
        %v666 = vunpack.c.h.b16 %v534
        %v667 = vunpack.c.l.b16 %v535
        %v668 = vunpack.c.h.b16 %v535
        %v669 = vunpack.c.l.b16 %v536
        %v670 = vunpack.c.h.b16 %v536
        %v671 = vunpack.c.l.b16 %v537
        %v672 = vunpack.c.h.b16 %v537
        %v673 = vunpack.c.l.b16 %v538
        %v674 = vunpack.c.h.b16 %v538
        %v675 = vunpack.c.l.b16 %v539
        %v676 = vunpack.c.h.b16 %v539
        %v677 = vunpack.c.l.b16 %v540
        %v678 = vunpack.c.h.b16 %v540
        %v679 = vunpack.c.l.b16 %v541
        %v680 = vunpack.c.h.b16 %v541
        %v681 = vunpack.c.l.b16 %v542
        %v682 = vunpack.c.h.b16 %v542
        %v683 = vunpack.c.l.b16 %v543
        %v684 = vunpack.c.h.b16 %v543
        %v685 = vunpack.c.l.b16 %v544
        %v686 = vunpack.c.h.b16 %v544
        %v687 = vunpack.c.l.b16 %v545
        %v688 = vunpack.c.h.b16 %v545
        %v689 = vunpack.c.l.b16 %v546
        %v690 = vunpack.c.h.b16 %v546
        %v691 = vunpack.c.l.b16 %v547
        %v692 = vunpack.c.h.b16 %v547
        %v693 = vunpack.c.l.b16 %v548
        %v694 = vunpack.c.h.b16 %v548
        %v695 = vunpack.c.l.b16 %v549
        %v696 = vunpack.c.h.b16 %v549
        %v697 = vunpack.c.l.b16 %v550
        %v698 = vunpack.c.h.b16 %v550
        %v699 = vunpack.c.l.b16 %v551
        %v700 = vunpack.c.h.b16 %v551
        %v701 = vunpack.c.l.b16 %v552
        %v702 = vunpack.c.h.b16 %v552
        %v703 = vunpack.c.l.b16 %v553
        %v704 = vunpack.c.h.b16 %v553
        %v705 = vunpack.c.l.b16 %v554
        %v706 = vunpack.c.h.b16 %v554
        %v707 = vunpack.c.l.b16 %v555
        %v708 = vunpack.c.h.b16 %v555
        %v709 = vunpack.c.l.b16 %v556
        %v710 = vunpack.c.h.b16 %v556
        %v711 = vunpack.c.l.b16 %v557
        %v712 = vunpack.c.h.b16 %v557
        %v713 = vunpack.c.l.b16 %v558
        %v714 = vunpack.c.h.b16 %v558
        %v715 = vunpack.c.l.b16 %v559
        %v716 = vunpack.c.h.b16 %v559
        %v717 = vunpack.c.l.b16 %v560
        %v718 = vunpack.c.h.b16 %v560
        %v719 = vunpack.c.l.b16 %v561
        %v720 = vunpack.c.h.b16 %v561
        %v721 = vunpack.c.l.b16 %v562
        %v722 = vunpack.c.h.b16 %v562
        %v723 = vunpack.c.l.b16 %v563
        %v724 = vunpack.c.h.b16 %v563
        %v725 = vunpack.c.l.b16 %v564
        %v726 = vunpack.c.h.b16 %v564
        %v727 = vunpack.c.l.b16 %v565
        %v728 = vunpack.c.h.b16 %v565
        %v729 = vunpack.c.l.b16 %v566
        %v730 = vunpack.c.h.b16 %v566
        %v731 = vunpack.c.l.b16 %v567
        %v732 = vunpack.c.h.b16 %v567
        %v733 = vunpack.c.l.b16 %v568
        %v734 = vunpack.c.h.b16 %v568
        %v735 = vunpack.c.l.b16 %v569
        %v736 = vunpack.c.h.b16 %v569
        %v737 = vunpack.c.l.b16 %v570
        %v738 = vunpack.c.h.b16 %v570
        %v739 = vunpack.c.l.b16 %v571
        %v740 = vunpack.c.h.b16 %v571
        %v741 = vunpack.c.l.b16 %v572
        %v742 = vunpack.c.h.b16 %v572
        %v743 = vunpack.c.l.b16 %v573
        %v744 = vunpack.c.h.b16 %v573
        %v745 = vunpack.c.l.b16 %v574
        %v746 = vunpack.c.h.b16 %v574
        %v747 = vunpack.c.l.b16 %v575
        %v748 = vunpack.c.h.b16 %v575
        %v749 = vunpack.c.l.b16 %v576
        %v750 = vunpack.c.h.b16 %v576
        %v751 = vunpack.c.l.b16 %v577
        %v752 = vunpack.c.h.b16 %v577
        %v753 = vunpack.c.l.b16 %v578
        %v754 = vunpack.c.h.b16 %v578
        %v755 = vunpack.c.l.b16 %v579
        %v756 = vunpack.c.h.b16 %v579
        %v757 = vunpack.c.l.b16 %v580
        %v758 = vunpack.c.h.b16 %v580
        %v759 = vunpack.c.l.b16 %v581
        %v760 = vunpack.c.h.b16 %v581
        %v761 = vunpack.c.l.b16 %v582
        %v762 = vunpack.c.h.b16 %v582
        %v763 = vunpack.c.l.b16 %v583
        %v764 = vunpack.c.h.b16 %v583
        %v765 = vunpack.c.l.b16 %v584
        %v766 = vunpack.c.h.b16 %v584
        %v767 = vunpack.c.l.b16 %v585
        %v768 = vunpack.c.h.b16 %v585
        %v769 = vunpack.c.l.b16 %v586
        %v770 = vunpack.c.h.b16 %v586
        %v771 = vunpack.c.l.b16 %v587
        %v772 = vunpack.c.h.b16 %v587
        %v773 = vunpack.c.l.b16 %v588
        %v774 = vunpack.c.h.b16 %v588
        %v775 = vunpack.c.l.b16 %v589
        %v776 = vunpack.c.h.b16 %v589
        %v777 = vunpack.c.l.b16 %v590
        %v778 = vunpack.c.h.b16 %v590
        %v779 = vunpack.c.l.b16 %v591
        %v780 = vunpack.c.h.b16 %v591
        %v781 = vunpack.c.l.b16 %v592
        %v782 = vunpack.c.h.b16 %v592
        %v783 = vunpack.c.l.b16 %v593
        %v784 = vunpack.c.h.b16 %v593
        %v785 = vunpack.c.l.b16 %v594
        %v786 = vunpack.c.h.b16 %v594
        %v787 = vpack.c.b16 %v663, %v659
        %v788 = vpack.c.b16 %v664, %v660
        %v789 = vpack.c.b16 %v665, %v661
        %v790 = vpack.c.b16 %v666, %v662
        %v791 = vpack.c.b16 %v671, %v667
        %v792 = vpack.c.b16 %v672, %v668
        %v793 = vpack.c.b16 %v673, %v669
        %v794 = vpack.c.b16 %v674, %v670
        %v795 = vpack.c.b16 %v679, %v675
        %v796 = vpack.c.b16 %v680, %v676
        %v797 = vpack.c.b16 %v681, %v677
        %v798 = vpack.c.b16 %v682, %v678
        %v799 = vpack.c.b16 %v687, %v683
        %v800 = vpack.c.b16 %v688, %v684
        %v801 = vpack.c.b16 %v689, %v685
        %v802 = vpack.c.b16 %v690, %v686
        %v803 = vpack.c.b16 %v695, %v691
        %v804 = vpack.c.b16 %v696, %v692
        %v805 = vpack.c.b16 %v697, %v693
        %v806 = vpack.c.b16 %v698, %v694
        %v807 = vpack.c.b16 %v703, %v699
        %v808 = vpack.c.b16 %v704, %v700
        %v809 = vpack.c.b16 %v705, %v701
        %v810 = vpack.c.b16 %v706, %v702
        %v811 = vpack.c.b16 %v711, %v707
        %v812 = vpack.c.b16 %v712, %v708
        %v813 = vpack.c.b16 %v713, %v709
        %v814 = vpack.c.b16 %v714, %v710
        %v815 = vpack.c.b16 %v719, %v715
        %v816 = vpack.c.b16 %v720, %v716
        %v817 = vpack.c.b16 %v721, %v717
        %v818 = vpack.c.b16 %v722, %v718
        %v819 = vpack.c.b16 %v727, %v723
        %v820 = vpack.c.b16 %v728, %v724
        %v821 = vpack.c.b16 %v729, %v725
        %v822 = vpack.c.b16 %v730, %v726
        %v823 = vpack.c.b16 %v735, %v731
        %v824 = vpack.c.b16 %v736, %v732
        %v825 = vpack.c.b16 %v737, %v733
        %v826 = vpack.c.b16 %v738, %v734
        %v827 = vpack.c.b16 %v743, %v739
        %v828 = vpack.c.b16 %v744, %v740
        %v829 = vpack.c.b16 %v745, %v741
        %v830 = vpack.c.b16 %v746, %v742
        %v831 = vpack.c.b16 %v751, %v747
        %v832 = vpack.c.b16 %v752, %v748
        %v833 = vpack.c.b16 %v753, %v749
        %v834 = vpack.c.b16 %v754, %v750
        %v835 = vpack.c.b16 %v759, %v755
        %v836 = vpack.c.b16 %v760, %v756
        %v837 = vpack.c.b16 %v761, %v757
        %v838 = vpack.c.b16 %v762, %v758
        %v839 = vpack.c.b16 %v767, %v763
        %v840 = vpack.c.b16 %v768, %v764
        %v841 = vpack.c.b16 %v769, %v765
        %v842 = vpack.c.b16 %v770, %v766
        %v843 = vpack.c.b16 %v775, %v771
        %v844 = vpack.c.b16 %v776, %v772
        %v845 = vpack.c.b16 %v777, %v773
        %v846 = vpack.c.b16 %v778, %v774
        %v847 = vpack.c.b16 %v783, %v779
        %v848 = vpack.c.b16 %v784, %v780
        %v849 = vpack.c.b16 %v785, %v781
        %v850 = vpack.c.b16 %v786, %v782
        %v979 = vunpack.c.l.b16 %v435
        %v980 = vunpack.c.l.b16 %v436
        %v981 = vunpack.c.l.b16 %v437
        %v982 = vunpack.c.l.b16 %v438
        %v983 = vunpack.c.l.b16 %v439
        %v984 = vunpack.c.l.b16 %v440
        %v985 = vunpack.c.l.b16 %v441
        %v986 = vunpack.c.l.b16 %v442
        %v987 = vunpack.c.l.b16 %v443
        %v988 = vunpack.c.l.b16 %v444
        %v989 = vunpack.c.l.b16 %v445
        %v990 = vunpack.c.l.b16 %v446
        %v991 = vunpack.c.l.b16 %v447
        %v992 = vunpack.c.l.b16 %v448
        %v993 = vunpack.c.l.b16 %v449
        %v994 = vunpack.c.l.b16 %v450
        %v995 = vunpack.c.l.b16 %v451
        %v996 = vunpack.c.l.b16 %v452
        %v997 = vunpack.c.l.b16 %v453
        %v998 = vunpack.c.l.b16 %v454
        %v999 = vunpack.c.l.b16 %v455
        %v1000 = vunpack.c.l.b16 %v456
        %v1001 = vunpack.c.l.b16 %v457
        %v1002 = vunpack.c.l.b16 %v458
        %v1003 = vunpack.c.l.b16 %v459
        %v1004 = vunpack.c.l.b16 %v460
        %v1005 = vunpack.c.l.b16 %v461
        %v1006 = vunpack.c.l.b16 %v462
        %v1007 = vunpack.c.l.b16 %v463
        %v1008 = vunpack.c.l.b16 %v464
        %v1009 = vunpack.c.l.b16 %v465
        %v1010 = vunpack.c.l.b16 %v466
        %v1011 = vunpack.c.l.b16 %v467
        %v1012 = vunpack.c.l.b16 %v468
        %v1013 = vunpack.c.l.b16 %v469
        %v1014 = vunpack.c.l.b16 %v470
        %v1015 = vunpack.c.l.b16 %v471
        %v1016 = vunpack.c.l.b16 %v472
        %v1017 = vunpack.c.l.b16 %v473
        %v1018 = vunpack.c.l.b16 %v474
        %v1019 = vunpack.c.l.b16 %v475
        %v1020 = vunpack.c.l.b16 %v476
        %v1021 = vunpack.c.l.b16 %v477
        %v1022 = vunpack.c.l.b16 %v478
        %v1023 = vunpack.c.l.b16 %v479
        %v1024 = vunpack.c.l.b16 %v480
        %v1025 = vunpack.c.l.b16 %v481
        %v1026 = vunpack.c.l.b16 %v482
        %v1027 = vunpack.c.l.b16 %v483
        %v1028 = vunpack.c.l.b16 %v484
        %v1029 = vunpack.c.l.b16 %v485
        %v1030 = vunpack.c.l.b16 %v486
        %v1031 = vunpack.c.l.b16 %v487
        %v1032 = vunpack.c.l.b16 %v488
        %v1033 = vunpack.c.l.b16 %v489
        %v1034 = vunpack.c.l.b16 %v490
        %v1035 = vunpack.c.l.b16 %v491
        %v1036 = vunpack.c.l.b16 %v492
        %v1037 = vunpack.c.l.b16 %v493
        %v1038 = vunpack.c.l.b16 %v494
        %v1039 = vunpack.c.l.b16 %v495
        %v1040 = vunpack.c.l.b16 %v496
        %v1041 = vunpack.c.l.b16 %v497
        %v1042 = vunpack.c.l.b16 %v498
        %v1043 = vpack.c.b16 %v980, %v979
        %v1044 = vpack.c.b16 %v982, %v981
        %v1045 = vpack.c.b16 %v984, %v983
        %v1046 = vpack.c.b16 %v986, %v985
        %v1047 = vpack.c.b16 %v988, %v987
        %v1048 = vpack.c.b16 %v990, %v989
        %v1049 = vpack.c.b16 %v992, %v991
        %v1050 = vpack.c.b16 %v994, %v993
        %v1051 = vpack.c.b16 %v996, %v995
        %v1052 = vpack.c.b16 %v998, %v997
        %v1053 = vpack.c.b16 %v1000, %v999
        %v1054 = vpack.c.b16 %v1002, %v1001
        %v1055 = vpack.c.b16 %v1004, %v1003
        %v1056 = vpack.c.b16 %v1006, %v1005
        %v1057 = vpack.c.b16 %v1008, %v1007
        %v1058 = vpack.c.b16 %v1010, %v1009
        %v1059 = vpack.c.b16 %v1012, %v1011
        %v1060 = vpack.c.b16 %v1014, %v1013
        %v1061 = vpack.c.b16 %v1016, %v1015
        %v1062 = vpack.c.b16 %v1018, %v1017
        %v1063 = vpack.c.b16 %v1020, %v1019
        %v1064 = vpack.c.b16 %v1022, %v1021
        %v1065 = vpack.c.b16 %v1024, %v1023
        %v1066 = vpack.c.b16 %v1026, %v1025
        %v1067 = vpack.c.b16 %v1028, %v1027
        %v1068 = vpack.c.b16 %v1030, %v1029
        %v1069 = vpack.c.b16 %v1032, %v1031
        %v1070 = vpack.c.b16 %v1034, %v1033
        %v1071 = vpack.c.b16 %v1036, %v1035
        %v1072 = vpack.c.b16 %v1038, %v1037
        %v1073 = vpack.c.b16 %v1040, %v1039
        %v1074 = vpack.c.b16 %v1042, %v1041
        %1107 = vmatprep.subr.bf16.mxu0 0
        %1108 = vmatpush1.bf16.msra.mxu0 %v1043
        %1109 = vmatprep.subr.bf16.mxu0 0
        %1110 = vmatpush1.bf16.msra.mxu0 %v1044
        %1111 = vmatprep.subr.bf16.mxu0 0
        %1112 = vmatpush1.bf16.msra.mxu0 %v1045
        %1113 = vmatprep.subr.bf16.mxu0 0
        %1114 = vmatpush1.bf16.msra.mxu0 %v1046
        %1115 = vmatprep.subr.bf16.mxu0 0
        %1116 = vmatpush1.bf16.msra.mxu0 %v1047
        %1117 = vmatprep.subr.bf16.mxu0 0
        %1118 = vmatpush1.bf16.msra.mxu0 %v1048
        %1119 = vmatprep.subr.bf16.mxu0 0
        %1120 = vmatpush1.bf16.msra.mxu0 %v1049
        %1121 = vmatprep.subr.bf16.mxu0 0
        %1122 = vmatpush1.bf16.msra.mxu0 %v1050
        %1123 = vmatprep.subr.bf16.mxu0 0
        %1124 = vmatpush1.bf16.msra.mxu0 %v1051
        %1125 = vmatprep.subr.bf16.mxu0 0
        %1126 = vmatpush1.bf16.msra.mxu0 %v1052
        %1127 = vmatprep.subr.bf16.mxu0 0
        %1128 = vmatpush1.bf16.msra.mxu0 %v1053
        %1129 = vmatprep.subr.bf16.mxu0 0
        %1130 = vmatpush1.bf16.msra.mxu0 %v1054
        %1131 = vmatprep.subr.bf16.mxu0 0
        %1132 = vmatpush1.bf16.msra.mxu0 %v1055
        %1133 = vmatprep.subr.bf16.mxu0 0
        %1134 = vmatpush1.bf16.msra.mxu0 %v1056
        %1135 = vmatprep.subr.bf16.mxu0 0
        %1136 = vmatpush1.bf16.msra.mxu0 %v1057
        %1137 = vmatprep.subr.bf16.mxu0 0
        %1138 = vmatpush1.bf16.msra.mxu0 %v1058
        %1139 = vmatprep.mubr.bf16.mxu0 %v788
        %1140 = vmatmul.mubr.bf16.gmra.mrb[0].mxu0 %v787
        %v1141 = vpop.f32.mrb[0].mxu0
        %v1142 = vadd.f32 0.0, %v1141
        %v1143 = vpop.f32.mrb[0].mxu0
        %v1144 = vpop.f32.mrb[0].mxu0
        %v1145 = vadd.f32 0.0, %v1144
        %v1146 = vpop.f32.mrb[0].mxu0
        %1147 = vmatprep.mubr.bf16.mxu0 %v792
        %1148 = vmatmul.mubr.bf16.gmra.mrb[0].mxu0 %v791
        %v1149 = vpop.f32.mrb[0].mxu0
        %v1150 = vadd.f32 0.0, %v1149
        %v1151 = vpop.f32.mrb[0].mxu0
        %v1152 = vpop.f32.mrb[0].mxu0
        %v1153 = vadd.f32 0.0, %v1152
        %v1154 = vpop.f32.mrb[0].mxu0
        %1155 = vmatprep.mubr.bf16.mxu0 %v796
        %1156 = vmatmul.mubr.bf16.gmra.mrb[0].mxu0 %v795
        %v1157 = vpop.f32.mrb[0].mxu0
        %v1158 = vadd.f32 0.0, %v1157
        %v1159 = vpop.f32.mrb[0].mxu0
        %v1160 = vpop.f32.mrb[0].mxu0
        %v1161 = vadd.f32 0.0, %v1160
        %v1162 = vpop.f32.mrb[0].mxu0
        %1163 = vmatprep.mubr.bf16.mxu0 %v800
        %1164 = vmatmul.mubr.bf16.gmra.mrb[0].mxu0 %v799
        %v1165 = vpop.f32.mrb[0].mxu0
        %v1166 = vadd.f32 0.0, %v1165
        %v1167 = vpop.f32.mrb[0].mxu0
        %v1168 = vpop.f32.mrb[0].mxu0
        %v1169 = vadd.f32 0.0, %v1168
        %v1170 = vpop.f32.mrb[0].mxu0
        %1171 = vmatprep.mubr.bf16.mxu0 %v804
        %1172 = vmatmul.mubr.bf16.gmra.mrb[0].mxu0 %v803
        %v1173 = vpop.f32.mrb[0].mxu0
        %v1174 = vadd.f32 0.0, %v1173
        %v1175 = vpop.f32.mrb[0].mxu0
        %v1176 = vpop.f32.mrb[0].mxu0
        %v1177 = vadd.f32 0.0, %v1176
        %v1178 = vpop.f32.mrb[0].mxu0
        %1179 = vmatprep.mubr.bf16.mxu0 %v808
        %1180 = vmatmul.mubr.bf16.gmra.mrb[0].mxu0 %v807
        %v1181 = vpop.f32.mrb[0].mxu0
        %v1182 = vadd.f32 0.0, %v1181
        %v1183 = vpop.f32.mrb[0].mxu0
        %v1184 = vpop.f32.mrb[0].mxu0
        %v1185 = vadd.f32 0.0, %v1184
        %v1186 = vpop.f32.mrb[0].mxu0
        %1187 = vmatprep.mubr.bf16.mxu0 %v812
        %1188 = vmatmul.mubr.bf16.gmra.mrb[0].mxu0 %v811
        %v1189 = vpop.f32.mrb[0].mxu0
        %v1190 = vadd.f32 0.0, %v1189
        %v1191 = vpop.f32.mrb[0].mxu0
        %v1192 = vpop.f32.mrb[0].mxu0
        %v1193 = vadd.f32 0.0, %v1192
        %v1194 = vpop.f32.mrb[0].mxu0
        %1195 = vmatprep.mubr.bf16.mxu0 %v816
        %1196 = vmatmul.mubr.bf16.gmra.mrb[0].mxu0 %v815
        %v1197 = vpop.f32.mrb[0].mxu0
        %v1198 = vadd.f32 0.0, %v1197
        %v1199 = vpop.f32.mrb[0].mxu0
        %v1200 = vpop.f32.mrb[0].mxu0
        %v1201 = vadd.f32 0.0, %v1200
        %v1202 = vpop.f32.mrb[0].mxu0
        %1203 = vmatprep.mubr.bf16.mxu0 %v820
        %1204 = vmatmul.mubr.bf16.gmra.mrb[0].mxu0 %v819
        %v1205 = vpop.f32.mrb[0].mxu0
        %v1206 = vadd.f32 0.0, %v1205
        %v1207 = vpop.f32.mrb[0].mxu0
        %v1208 = vpop.f32.mrb[0].mxu0
        %v1209 = vadd.f32 0.0, %v1208
        %v1210 = vpop.f32.mrb[0].mxu0
        %1211 = vmatprep.mubr.bf16.mxu0 %v824
        %1212 = vmatmul.mubr.bf16.gmra.mrb[0].mxu0 %v823
        %v1213 = vpop.f32.mrb[0].mxu0
        %v1214 = vadd.f32 0.0, %v1213
        %v1215 = vpop.f32.mrb[0].mxu0
        %v1216 = vpop.f32.mrb[0].mxu0
        %v1217 = vadd.f32 0.0, %v1216
        %v1218 = vpop.f32.mrb[0].mxu0
        %1219 = vmatprep.mubr.bf16.mxu0 %v828
        %1220 = vmatmul.mubr.bf16.gmra.mrb[0].mxu0 %v827
        %v1221 = vpop.f32.mrb[0].mxu0
        %v1222 = vadd.f32 0.0, %v1221
        %v1223 = vpop.f32.mrb[0].mxu0
        %v1224 = vpop.f32.mrb[0].mxu0
        %v1225 = vadd.f32 0.0, %v1224
        %v1226 = vpop.f32.mrb[0].mxu0
        %1227 = vmatprep.mubr.bf16.mxu0 %v832
        %1228 = vmatmul.mubr.bf16.gmra.mrb[0].mxu0 %v831
        %v1229 = vpop.f32.mrb[0].mxu0
        %v1230 = vadd.f32 0.0, %v1229
        %v1231 = vpop.f32.mrb[0].mxu0
        %v1232 = vpop.f32.mrb[0].mxu0
        %v1233 = vadd.f32 0.0, %v1232
        %v1234 = vpop.f32.mrb[0].mxu0
        %1235 = vmatprep.mubr.bf16.mxu0 %v836
        %1236 = vmatmul.mubr.bf16.gmra.mrb[0].mxu0 %v835
        %v1237 = vpop.f32.mrb[0].mxu0
        %v1238 = vadd.f32 0.0, %v1237
        %v1239 = vpop.f32.mrb[0].mxu0
        %v1240 = vpop.f32.mrb[0].mxu0
        %v1241 = vadd.f32 0.0, %v1240
        %v1242 = vpop.f32.mrb[0].mxu0
        %1243 = vmatprep.mubr.bf16.mxu0 %v840
        %1244 = vmatmul.mubr.bf16.gmra.mrb[0].mxu0 %v839
        %v1245 = vpop.f32.mrb[0].mxu0
        %v1246 = vadd.f32 0.0, %v1245
        %v1247 = vpop.f32.mrb[0].mxu0
        %v1248 = vpop.f32.mrb[0].mxu0
        %v1249 = vadd.f32 0.0, %v1248
        %v1250 = vpop.f32.mrb[0].mxu0
        %1251 = vmatprep.mubr.bf16.mxu0 %v844
        %1252 = vmatmul.mubr.bf16.gmra.mrb[0].mxu0 %v843
        %v1253 = vpop.f32.mrb[0].mxu0
        %v1254 = vadd.f32 0.0, %v1253
        %v1255 = vpop.f32.mrb[0].mxu0
        %v1256 = vpop.f32.mrb[0].mxu0
        %v1257 = vadd.f32 0.0, %v1256
        %v1258 = vpop.f32.mrb[0].mxu0
        %1259 = vmatprep.mubr.bf16.mxu0 %v848
        %1260 = vmatmul.mubr.bf16.gmra.mrb[0].mxu0 %v847
        %v1261 = vpop.f32.mrb[0].mxu0
        %v1262 = vadd.f32 0.0, %v1261
        %v1263 = vpop.f32.mrb[0].mxu0
        %v1264 = vpop.f32.mrb[0].mxu0
        %v1265 = vadd.f32 0.0, %v1264
        %v1266 = vpop.f32.mrb[0].mxu0
        %1267 = vdwg.mxu0
        %1268 = vmatprep.subr.bf16.mxu0 0
        %1269 = vmatpush1.bf16.msra.mxu0 %v1059
        %1270 = vmatprep.subr.bf16.mxu0 0
        %1271 = vmatpush1.bf16.msra.mxu0 %v1060
        %1272 = vmatprep.subr.bf16.mxu0 0
        %1273 = vmatpush1.bf16.msra.mxu0 %v1061
        %1274 = vmatprep.subr.bf16.mxu0 0
        %1275 = vmatpush1.bf16.msra.mxu0 %v1062
        %1276 = vmatprep.subr.bf16.mxu0 0
        %1277 = vmatpush1.bf16.msra.mxu0 %v1063
        %1278 = vmatprep.subr.bf16.mxu0 0
        %1279 = vmatpush1.bf16.msra.mxu0 %v1064
        %1280 = vmatprep.subr.bf16.mxu0 0
        %1281 = vmatpush1.bf16.msra.mxu0 %v1065
        %1282 = vmatprep.subr.bf16.mxu0 0
        %1283 = vmatpush1.bf16.msra.mxu0 %v1066
        %1284 = vmatprep.subr.bf16.mxu0 0
        %1285 = vmatpush1.bf16.msra.mxu0 %v1067
        %1286 = vmatprep.subr.bf16.mxu0 0
        %1287 = vmatpush1.bf16.msra.mxu0 %v1068
        %1288 = vmatprep.subr.bf16.mxu0 0
        %1289 = vmatpush1.bf16.msra.mxu0 %v1069
        %1290 = vmatprep.subr.bf16.mxu0 0
        %1291 = vmatpush1.bf16.msra.mxu0 %v1070
        %1292 = vmatprep.subr.bf16.mxu0 0
        %1293 = vmatpush1.bf16.msra.mxu0 %v1071
        %1294 = vmatprep.subr.bf16.mxu0 0
        %1295 = vmatpush1.bf16.msra.mxu0 %v1072
        %1296 = vmatprep.subr.bf16.mxu0 0
        %1297 = vmatpush1.bf16.msra.mxu0 %v1073
        %1298 = vmatprep.subr.bf16.mxu0 0
        %1299 = vmatpush1.bf16.msra.mxu0 %v1074
        %1300 = vmatprep.mubr.bf16.mxu0 %v790
        %1301 = vmatmul.mubr.bf16.gmra.mrb[0].mxu0 %v789
        %v1302 = vpop.f32.mrb[0].mxu0
        %v1303 = vadd.f32 %v1142, %v1302
        %v1304 = vpop.f32.mrb[0].mxu0
        %v1305 = vpop.f32.mrb[0].mxu0
        %v1306 = vadd.f32 %v1145, %v1305
        %v1307 = vpop.f32.mrb[0].mxu0
        %1308 = vmatprep.mubr.bf16.mxu0 %v794
        %1309 = vmatmul.mubr.bf16.gmra.mrb[0].mxu0 %v793
        %v1310 = vpop.f32.mrb[0].mxu0
        %v1311 = vadd.f32 %v1150, %v1310
        %v1312 = vpop.f32.mrb[0].mxu0
        %v1313 = vpop.f32.mrb[0].mxu0
        %v1314 = vadd.f32 %v1153, %v1313
        %v1315 = vpop.f32.mrb[0].mxu0
        %1316 = vmatprep.mubr.bf16.mxu0 %v798
        %1317 = vmatmul.mubr.bf16.gmra.mrb[0].mxu0 %v797
        %v1318 = vpop.f32.mrb[0].mxu0
        %v1319 = vadd.f32 %v1158, %v1318
        %v1320 = vpop.f32.mrb[0].mxu0
        %v1321 = vpop.f32.mrb[0].mxu0
        %v1322 = vadd.f32 %v1161, %v1321
        %v1323 = vpop.f32.mrb[0].mxu0
        %1324 = vmatprep.mubr.bf16.mxu0 %v802
        %1325 = vmatmul.mubr.bf16.gmra.mrb[0].mxu0 %v801
        %v1326 = vpop.f32.mrb[0].mxu0
        %v1327 = vadd.f32 %v1166, %v1326
        %v1328 = vpop.f32.mrb[0].mxu0
        %v1329 = vpop.f32.mrb[0].mxu0
        %v1330 = vadd.f32 %v1169, %v1329
        %v1331 = vpop.f32.mrb[0].mxu0
        %1332 = vmatprep.mubr.bf16.mxu0 %v806
        %1333 = vmatmul.mubr.bf16.gmra.mrb[0].mxu0 %v805
        %v1334 = vpop.f32.mrb[0].mxu0
        %v1335 = vadd.f32 %v1174, %v1334
        %v1336 = vpop.f32.mrb[0].mxu0
        %v1337 = vpop.f32.mrb[0].mxu0
        %v1338 = vadd.f32 %v1177, %v1337
        %v1339 = vpop.f32.mrb[0].mxu0
        %1340 = vmatprep.mubr.bf16.mxu0 %v810
        %1341 = vmatmul.mubr.bf16.gmra.mrb[0].mxu0 %v809
        %v1342 = vpop.f32.mrb[0].mxu0
        %v1343 = vadd.f32 %v1182, %v1342
        %v1344 = vpop.f32.mrb[0].mxu0
        %v1345 = vpop.f32.mrb[0].mxu0
        %v1346 = vadd.f32 %v1185, %v1345
        %v1347 = vpop.f32.mrb[0].mxu0
        %1348 = vmatprep.mubr.bf16.mxu0 %v814
        %1349 = vmatmul.mubr.bf16.gmra.mrb[0].mxu0 %v813
        %v1350 = vpop.f32.mrb[0].mxu0
        %v1351 = vadd.f32 %v1190, %v1350
        %v1352 = vpop.f32.mrb[0].mxu0
        %v1353 = vpop.f32.mrb[0].mxu0
        %v1354 = vadd.f32 %v1193, %v1353
        %v1355 = vpop.f32.mrb[0].mxu0
        %1356 = vmatprep.mubr.bf16.mxu0 %v818
        %1357 = vmatmul.mubr.bf16.gmra.mrb[0].mxu0 %v817
        %v1358 = vpop.f32.mrb[0].mxu0
        %v1359 = vadd.f32 %v1198, %v1358
        %v1360 = vpop.f32.mrb[0].mxu0
        %v1361 = vpop.f32.mrb[0].mxu0
        %v1362 = vadd.f32 %v1201, %v1361
        %v1363 = vpop.f32.mrb[0].mxu0
        %1364 = vmatprep.mubr.bf16.mxu0 %v822
        %1365 = vmatmul.mubr.bf16.gmra.mrb[0].mxu0 %v821
        %v1366 = vpop.f32.mrb[0].mxu0
        %v1367 = vadd.f32 %v1206, %v1366
        %v1368 = vpop.f32.mrb[0].mxu0
        %v1369 = vpop.f32.mrb[0].mxu0
        %v1370 = vadd.f32 %v1209, %v1369
        %v1371 = vpop.f32.mrb[0].mxu0
        %1372 = vmatprep.mubr.bf16.mxu0 %v826
        %1373 = vmatmul.mubr.bf16.gmra.mrb[0].mxu0 %v825
        %v1374 = vpop.f32.mrb[0].mxu0
        %v1375 = vadd.f32 %v1214, %v1374
        %v1376 = vpop.f32.mrb[0].mxu0
        %v1377 = vpop.f32.mrb[0].mxu0
        %v1378 = vadd.f32 %v1217, %v1377
        %v1379 = vpop.f32.mrb[0].mxu0
        %1380 = vmatprep.mubr.bf16.mxu0 %v830
        %1381 = vmatmul.mubr.bf16.gmra.mrb[0].mxu0 %v829
        %v1382 = vpop.f32.mrb[0].mxu0
        %v1383 = vadd.f32 %v1222, %v1382
        %v1384 = vpop.f32.mrb[0].mxu0
        %v1385 = vpop.f32.mrb[0].mxu0
        %v1386 = vadd.f32 %v1225, %v1385
        %v1387 = vpop.f32.mrb[0].mxu0
        %1388 = vmatprep.mubr.bf16.mxu0 %v834
        %1389 = vmatmul.mubr.bf16.gmra.mrb[0].mxu0 %v833
        %v1390 = vpop.f32.mrb[0].mxu0
        %v1391 = vadd.f32 %v1230, %v1390
        %v1392 = vpop.f32.mrb[0].mxu0
        %v1393 = vpop.f32.mrb[0].mxu0
        %v1394 = vadd.f32 %v1233, %v1393
        %v1395 = vpop.f32.mrb[0].mxu0
        %1396 = vmatprep.mubr.bf16.mxu0 %v838
        %1397 = vmatmul.mubr.bf16.gmra.mrb[0].mxu0 %v837
        %v1398 = vpop.f32.mrb[0].mxu0
        %v1399 = vadd.f32 %v1238, %v1398
        %v1400 = vpop.f32.mrb[0].mxu0
        %v1401 = vpop.f32.mrb[0].mxu0
        %v1402 = vadd.f32 %v1241, %v1401
        %v1403 = vpop.f32.mrb[0].mxu0
        %1404 = vmatprep.mubr.bf16.mxu0 %v842
        %1405 = vmatmul.mubr.bf16.gmra.mrb[0].mxu0 %v841
        %v1406 = vpop.f32.mrb[0].mxu0
        %v1407 = vadd.f32 %v1246, %v1406
        %v1408 = vpop.f32.mrb[0].mxu0
        %v1409 = vpop.f32.mrb[0].mxu0
        %v1410 = vadd.f32 %v1249, %v1409
        %v1411 = vpop.f32.mrb[0].mxu0
        %1412 = vmatprep.mubr.bf16.mxu0 %v846
        %1413 = vmatmul.mubr.bf16.gmra.mrb[0].mxu0 %v845
        %v1414 = vpop.f32.mrb[0].mxu0
        %v1415 = vadd.f32 %v1254, %v1414
        %v1416 = vpop.f32.mrb[0].mxu0
        %v1417 = vpop.f32.mrb[0].mxu0
        %v1418 = vadd.f32 %v1257, %v1417
        %v1419 = vpop.f32.mrb[0].mxu0
        %1420 = vmatprep.mubr.bf16.mxu0 %v850
        %1421 = vmatmul.mubr.bf16.gmra.mrb[0].mxu0 %v849
        %v1422 = vpop.f32.mrb[0].mxu0
        %v1423 = vadd.f32 %v1262, %v1422
        %v1424 = vpop.f32.mrb[0].mxu0
        %v1425 = vpop.f32.mrb[0].mxu0
        %v1426 = vadd.f32 %v1265, %v1425
        %v1427 = vpop.f32.mrb[0].mxu0
        %1428 = vdwg.mxu0
        %v1429 = vadd.f32 %v499, %v1303
        %v1430 = vadd.f32 %v500, %v1306
        %v1431 = vadd.f32 %v501, %v1311
        %v1432 = vadd.f32 %v502, %v1314
        %v1433 = vadd.f32 %v503, %v1319
        %v1434 = vadd.f32 %v504, %v1322
        %v1435 = vadd.f32 %v505, %v1327
        %v1436 = vadd.f32 %v506, %v1330
        %v1437 = vadd.f32 %v507, %v1335
        %v1438 = vadd.f32 %v508, %v1338
        %v1439 = vadd.f32 %v509, %v1343
        %v1440 = vadd.f32 %v510, %v1346
        %v1441 = vadd.f32 %v511, %v1351
        %v1442 = vadd.f32 %v512, %v1354
        %v1443 = vadd.f32 %v513, %v1359
        %v1444 = vadd.f32 %v514, %v1362
        %v1445 = vadd.f32 %v515, %v1367
        %v1446 = vadd.f32 %v516, %v1370
        %v1447 = vadd.f32 %v517, %v1375
        %v1448 = vadd.f32 %v518, %v1378
        %v1449 = vadd.f32 %v519, %v1383
        %v1450 = vadd.f32 %v520, %v1386
        %v1451 = vadd.f32 %v521, %v1391
        %v1452 = vadd.f32 %v522, %v1394
        %v1453 = vadd.f32 %v523, %v1399
        %v1454 = vadd.f32 %v524, %v1402
        %v1455 = vadd.f32 %v525, %v1407
        %v1456 = vadd.f32 %v526, %v1410
        %v1457 = vadd.f32 %v527, %v1415
        %v1458 = vadd.f32 %v528, %v1418
        %v1459 = vadd.f32 %v529, %v1423
        %v1460 = vadd.f32 %v530, %v1426
        %1461 = vst [vmem:[#allocation2] sm:$0xff] %v1429
        %1462 = vst [vmem:[#allocation2 + $0x8] sm:$0xff] %v1430
        %1463 = vst [vmem:[#allocation2 + $0x10] sm:$0xff] %v1431
        %1464 = vst [vmem:[#allocation2 + $0x18] sm:$0xff] %v1432
        %1465 = vst [vmem:[#allocation2 + $0x20] sm:$0xff] %v1433
        %1466 = vst [vmem:[#allocation2 + $0x28] sm:$0xff] %v1434
        %1467 = vst [vmem:[#allocation2 + $0x30] sm:$0xff] %v1435
        %1468 = vst [vmem:[#allocation2 + $0x38] sm:$0xff] %v1436
        %1469 = vst [vmem:[#allocation2 + $0x40] sm:$0xff] %v1437
        %1470 = vst [vmem:[#allocation2 + $0x48] sm:$0xff] %v1438
        %1471 = vst [vmem:[#allocation2 + $0x50] sm:$0xff] %v1439
        %1472 = vst [vmem:[#allocation2 + $0x58] sm:$0xff] %v1440
        %1473 = vst [vmem:[#allocation2 + $0x60] sm:$0xff] %v1441
        %1474 = vst [vmem:[#allocation2 + $0x68] sm:$0xff] %v1442
        %1475 = vst [vmem:[#allocation2 + $0x70] sm:$0xff] %v1443
        %1476 = vst [vmem:[#allocation2 + $0x78] sm:$0xff] %v1444
        %1477 = vst [vmem:[#allocation2 + $0x80] sm:$0xff] %v1445
        %1478 = vst [vmem:[#allocation2 + $0x88] sm:$0xff] %v1446
        %1479 = vst [vmem:[#allocation2 + $0x90] sm:$0xff] %v1447
        %1480 = vst [vmem:[#allocation2 + $0x98] sm:$0xff] %v1448
        %1481 = vst [vmem:[#allocation2 + $0xa0] sm:$0xff] %v1449
        %1482 = vst [vmem:[#allocation2 + $0xa8] sm:$0xff] %v1450
        %1483 = vst [vmem:[#allocation2 + $0xb0] sm:$0xff] %v1451
        %1484 = vst [vmem:[#allocation2 + $0xb8] sm:$0xff] %v1452
        %1485 = vst [vmem:[#allocation2 + $0xc0] sm:$0xff] %v1453
        %1486 = vst [vmem:[#allocation2 + $0xc8] sm:$0xff] %v1454
        %1487 = vst [vmem:[#allocation2 + $0xd0] sm:$0xff] %v1455
        %1488 = vst [vmem:[#allocation2 + $0xd8] sm:$0xff] %v1456
        %1489 = vst [vmem:[#allocation2 + $0xe0] sm:$0xff] %v1457
        %1490 = vst [vmem:[#allocation2 + $0xe8] sm:$0xff] %v1458
        %1491 = vst [vmem:[#allocation2 + $0xf0] sm:$0xff] %v1459
        %1492 = vst [vmem:[#allocation2 + $0xf8] sm:$0xff] %v1460
        // Predicated region
        $region65: #{tpu_custom_call.1} parent=55 // pred_check
          %p1493 = pneg %p394
        $region66: #{tpu_custom_call.1} parent=55 // pred_check_branch
          %1495 = sbr.rel (%p1493) target = $region68
        $region67: #{tpu_custom_call.1} parent=55 // pred_region
          %v1496 = vld [vmem:[#allocation2] sm:$0xff]
          %v1497 = vld [vmem:[#allocation2 + $0x8] sm:$0xff]
          %v1498 = vld [vmem:[#allocation2 + $0x10] sm:$0xff]
          %v1499 = vld [vmem:[#allocation2 + $0x18] sm:$0xff]
          %v1500 = vld [vmem:[#allocation2 + $0x20] sm:$0xff]
          %v1501 = vld [vmem:[#allocation2 + $0x28] sm:$0xff]
          %v1502 = vld [vmem:[#allocation2 + $0x30] sm:$0xff]
          %v1503 = vld [vmem:[#allocation2 + $0x38] sm:$0xff]
          %v1504 = vld [vmem:[#allocation2 + $0x40] sm:$0xff]
          %v1505 = vld [vmem:[#allocation2 + $0x48] sm:$0xff]
          %v1506 = vld [vmem:[#allocation2 + $0x50] sm:$0xff]
          %v1507 = vld [vmem:[#allocation2 + $0x58] sm:$0xff]
          %v1508 = vld [vmem:[#allocation2 + $0x60] sm:$0xff]
          %v1509 = vld [vmem:[#allocation2 + $0x68] sm:$0xff]
          %v1510 = vld [vmem:[#allocation2 + $0x70] sm:$0xff]
          %v1511 = vld [vmem:[#allocation2 + $0x78] sm:$0xff]
          %v1512 = vld [vmem:[#allocation2 + $0x80] sm:$0xff]
          %v1513 = vld [vmem:[#allocation2 + $0x88] sm:$0xff]
          %v1514 = vld [vmem:[#allocation2 + $0x90] sm:$0xff]
          %v1515 = vld [vmem:[#allocation2 + $0x98] sm:$0xff]
          %v1516 = vld [vmem:[#allocation2 + $0xa0] sm:$0xff]
          %v1517 = vld [vmem:[#allocation2 + $0xa8] sm:$0xff]
          %v1518 = vld [vmem:[#allocation2 + $0xb0] sm:$0xff]
          %v1519 = vld [vmem:[#allocation2 + $0xb8] sm:$0xff]
          %v1520 = vld [vmem:[#allocation2 + $0xc0] sm:$0xff]
          %v1521 = vld [vmem:[#allocation2 + $0xc8] sm:$0xff]
          %v1522 = vld [vmem:[#allocation2 + $0xd0] sm:$0xff]
          %v1523 = vld [vmem:[#allocation2 + $0xd8] sm:$0xff]
          %v1524 = vld [vmem:[#allocation2 + $0xe0] sm:$0xff]
          %v1525 = vld [vmem:[#allocation2 + $0xe8] sm:$0xff]
          %v1526 = vld [vmem:[#allocation2 + $0xf0] sm:$0xff]
          %v1527 = vld [vmem:[#allocation2 + $0xf8] sm:$0xff]
          %v1528 = vpack.c.bf16 %v1497, %v1496
          %v1529 = vpack.c.bf16 %v1499, %v1498
          %v1530 = vpack.c.bf16 %v1501, %v1500
          %v1531 = vpack.c.bf16 %v1503, %v1502
          %v1532 = vpack.c.bf16 %v1505, %v1504
          %v1533 = vpack.c.bf16 %v1507, %v1506
          %v1534 = vpack.c.bf16 %v1509, %v1508
          %v1535 = vpack.c.bf16 %v1511, %v1510
          %v1536 = vpack.c.bf16 %v1513, %v1512
          %v1537 = vpack.c.bf16 %v1515, %v1514
          %v1538 = vpack.c.bf16 %v1517, %v1516
          %v1539 = vpack.c.bf16 %v1519, %v1518
          %v1540 = vpack.c.bf16 %v1521, %v1520
          %v1541 = vpack.c.bf16 %v1523, %v1522
          %v1542 = vpack.c.bf16 %v1525, %v1524
          %v1543 = vpack.c.bf16 %v1527, %v1526
          %v1544 = vld [vmem:[%s2] sm:$0xff]
          %v1545 = vld [vmem:[%s2 + $0x8] sm:$0xff]
          %v1546 = vld [vmem:[%s2 + $0x10] sm:$0xff]
          %v1547 = vld [vmem:[%s2 + $0x18] sm:$0xff]
          %v1548 = vld [vmem:[%s2 + $0x20] sm:$0xff]
          %v1549 = vld [vmem:[%s2 + $0x28] sm:$0xff]
          %v1550 = vld [vmem:[%s2 + $0x30] sm:$0xff]
          %v1551 = vld [vmem:[%s2 + $0x38] sm:$0xff]
          %v1552 = vld [vmem:[%s2 + $0x40] sm:$0xff]
          %v1553 = vld [vmem:[%s2 + $0x48] sm:$0xff]
          %v1554 = vld [vmem:[%s2 + $0x50] sm:$0xff]
          %v1555 = vld [vmem:[%s2 + $0x58] sm:$0xff]
          %v1556 = vld [vmem:[%s2 + $0x60] sm:$0xff]
          %v1557 = vld [vmem:[%s2 + $0x68] sm:$0xff]
          %v1558 = vld [vmem:[%s2 + $0x70] sm:$0xff]
          %v1559 = vld [vmem:[%s2 + $0x78] sm:$0xff]
          %v1560 = vld [vmem:[%s390] sm:$0xff]
          %v1561 = vld [vmem:[%s390 + $0x8] sm:$0xff]
          %v1562 = vld [vmem:[%s390 + $0x10] sm:$0xff]
          %v1563 = vld [vmem:[%s390 + $0x18] sm:$0xff]
          %v1564 = vld [vmem:[%s390 + $0x20] sm:$0xff]
          %v1565 = vld [vmem:[%s390 + $0x28] sm:$0xff]
          %v1566 = vld [vmem:[%s390 + $0x30] sm:$0xff]
          %v1567 = vld [vmem:[%s390 + $0x38] sm:$0xff]
          %v1568 = vld [vmem:[%s390 + $0x40] sm:$0xff]
          %v1569 = vld [vmem:[%s390 + $0x48] sm:$0xff]
          %v1570 = vld [vmem:[%s390 + $0x50] sm:$0xff]
          %v1571 = vld [vmem:[%s390 + $0x58] sm:$0xff]
          %v1572 = vld [vmem:[%s390 + $0x60] sm:$0xff]
          %v1573 = vld [vmem:[%s390 + $0x68] sm:$0xff]
          %v1574 = vld [vmem:[%s390 + $0x70] sm:$0xff]
          %v1575 = vld [vmem:[%s390 + $0x78] sm:$0xff]
          %v1576 = vld [vmem:[%s390 + $0x80] sm:$0xff]
          %v1577 = vld [vmem:[%s390 + $0x88] sm:$0xff]
          %v1578 = vld [vmem:[%s390 + $0x90] sm:$0xff]
          %v1579 = vld [vmem:[%s390 + $0x98] sm:$0xff]
          %v1580 = vld [vmem:[%s390 + $0xa0] sm:$0xff]
          %v1581 = vld [vmem:[%s390 + $0xa8] sm:$0xff]
          %v1582 = vld [vmem:[%s390 + $0xb0] sm:$0xff]
          %v1583 = vld [vmem:[%s390 + $0xb8] sm:$0xff]
          %v1584 = vld [vmem:[%s390 + $0xc0] sm:$0xff]
          %v1585 = vld [vmem:[%s390 + $0xc8] sm:$0xff]
          %v1586 = vld [vmem:[%s390 + $0xd0] sm:$0xff]
          %v1587 = vld [vmem:[%s390 + $0xd8] sm:$0xff]
          %v1588 = vld [vmem:[%s390 + $0xe0] sm:$0xff]
          %v1589 = vld [vmem:[%s390 + $0xe8] sm:$0xff]
          %v1590 = vld [vmem:[%s390 + $0xf0] sm:$0xff]
          %v1591 = vld [vmem:[%s390 + $0xf8] sm:$0xff]
          %v1592 = vld [vmem:[%s3] sm:$0x3]
          %1594 = vset.pattern.permute.xlu0 0
          %1595 = vperm.xlu0 %1594, %v1560
          %v1596 = vpop.permute.xlu0 %1595
          %1599 = vset.pattern.permute.xlu0 0
          %1600 = vperm.xlu0 %1599, %v1561
          %v1601 = vpop.permute.xlu0 %1600
          %1604 = vset.pattern.permute.xlu0 0
          %1605 = vperm.xlu0 %1604, %v1562
          %v1606 = vpop.permute.xlu0 %1605
          %1609 = vset.pattern.permute.xlu0 0
          %1610 = vperm.xlu0 %1609, %v1563
          %v1611 = vpop.permute.xlu0 %1610
          %1614 = vset.pattern.permute.xlu0 0
          %1615 = vperm.xlu0 %1614, %v1564
          %v1616 = vpop.permute.xlu0 %1615
          %1619 = vset.pattern.permute.xlu0 0
          %1620 = vperm.xlu0 %1619, %v1565
          %v1621 = vpop.permute.xlu0 %1620
          %1624 = vset.pattern.permute.xlu0 0
          %1625 = vperm.xlu0 %1624, %v1566
          %v1626 = vpop.permute.xlu0 %1625
          %1629 = vset.pattern.permute.xlu0 0
          %1630 = vperm.xlu0 %1629, %v1567
          %v1631 = vpop.permute.xlu0 %1630
          %1634 = vset.pattern.permute.xlu0 0
          %1635 = vperm.xlu0 %1634, %v1568
          %v1636 = vpop.permute.xlu0 %1635
          %1639 = vset.pattern.permute.xlu0 0
          %1640 = vperm.xlu0 %1639, %v1569
          %v1641 = vpop.permute.xlu0 %1640
          %1644 = vset.pattern.permute.xlu0 0
          %1645 = vperm.xlu0 %1644, %v1570
          %v1646 = vpop.permute.xlu0 %1645
          %1649 = vset.pattern.permute.xlu0 0
          %1650 = vperm.xlu0 %1649, %v1571
          %v1651 = vpop.permute.xlu0 %1650
          %1654 = vset.pattern.permute.xlu0 0
          %1655 = vperm.xlu0 %1654, %v1572
          %v1656 = vpop.permute.xlu0 %1655
          %1659 = vset.pattern.permute.xlu0 0
          %1660 = vperm.xlu0 %1659, %v1573
          %v1661 = vpop.permute.xlu0 %1660
          %1664 = vset.pattern.permute.xlu0 0
          %1665 = vperm.xlu0 %1664, %v1574
          %v1666 = vpop.permute.xlu0 %1665
          %1669 = vset.pattern.permute.xlu0 0
          %1670 = vperm.xlu0 %1669, %v1575
          %v1671 = vpop.permute.xlu0 %1670
          %1674 = vset.pattern.permute.xlu0 0
          %1675 = vperm.xlu0 %1674, %v1576
          %v1676 = vpop.permute.xlu0 %1675
          %1679 = vset.pattern.permute.xlu0 0
          %1680 = vperm.xlu0 %1679, %v1577
          %v1681 = vpop.permute.xlu0 %1680
          %1684 = vset.pattern.permute.xlu0 0
          %1685 = vperm.xlu0 %1684, %v1578
          %v1686 = vpop.permute.xlu0 %1685
          %1689 = vset.pattern.permute.xlu0 0
          %1690 = vperm.xlu0 %1689, %v1579
          %v1691 = vpop.permute.xlu0 %1690
          %1694 = vset.pattern.permute.xlu0 0
          %1695 = vperm.xlu0 %1694, %v1580
          %v1696 = vpop.permute.xlu0 %1695
          %1699 = vset.pattern.permute.xlu0 0
          %1700 = vperm.xlu0 %1699, %v1581
          %v1701 = vpop.permute.xlu0 %1700
          %1704 = vset.pattern.permute.xlu0 0
          %1705 = vperm.xlu0 %1704, %v1582
          %v1706 = vpop.permute.xlu0 %1705
          %1709 = vset.pattern.permute.xlu0 0
          %1710 = vperm.xlu0 %1709, %v1583
          %v1711 = vpop.permute.xlu0 %1710
          %1714 = vset.pattern.permute.xlu0 0
          %1715 = vperm.xlu0 %1714, %v1584
          %v1716 = vpop.permute.xlu0 %1715
          %1719 = vset.pattern.permute.xlu0 0
          %1720 = vperm.xlu0 %1719, %v1585
          %v1721 = vpop.permute.xlu0 %1720
          %1724 = vset.pattern.permute.xlu0 0
          %1725 = vperm.xlu0 %1724, %v1586
          %v1726 = vpop.permute.xlu0 %1725
          %1729 = vset.pattern.permute.xlu0 0
          %1730 = vperm.xlu0 %1729, %v1587
          %v1731 = vpop.permute.xlu0 %1730
          %1734 = vset.pattern.permute.xlu0 0
          %1735 = vperm.xlu0 %1734, %v1588
          %v1736 = vpop.permute.xlu0 %1735
          %1739 = vset.pattern.permute.xlu0 0
          %1740 = vperm.xlu0 %1739, %v1589
          %v1741 = vpop.permute.xlu0 %1740
          %1744 = vset.pattern.permute.xlu0 0
          %1745 = vperm.xlu0 %1744, %v1590
          %v1746 = vpop.permute.xlu0 %1745
          %1749 = vset.pattern.permute.xlu0 0
          %1750 = vperm.xlu0 %1749, %v1591
          %v1751 = vpop.permute.xlu0 %1750
          %v1754 = vlaneseq
          %v1755 = vshrl.u32 %v1754, 7
          %v1756 = vsub.s32 0, %v1755
          %v1757 = vrot.slane %v1592, %v1756
          %v1758 = vlaneseq
          %v1759 = vshrl.u32 %v1758, 7
          %v1760 = vsub.s32 1, %v1759
          %v1761 = vrot.slane %v1592, %v1760
          %v1764 = vmul.f32 %v1596, %v1757
          %v1765 = vmul.f32 %v1596, %v1761
          %v1766 = vmul.f32 %v1601, %v1757
          %v1767 = vmul.f32 %v1601, %v1761
          %v1768 = vmul.f32 %v1606, %v1757
          %v1769 = vmul.f32 %v1606, %v1761
          %v1770 = vmul.f32 %v1611, %v1757
          %v1771 = vmul.f32 %v1611, %v1761
          %v1772 = vmul.f32 %v1616, %v1757
          %v1773 = vmul.f32 %v1616, %v1761
          %v1774 = vmul.f32 %v1621, %v1757
          %v1775 = vmul.f32 %v1621, %v1761
          %v1776 = vmul.f32 %v1626, %v1757
          %v1777 = vmul.f32 %v1626, %v1761
          %v1778 = vmul.f32 %v1631, %v1757
          %v1779 = vmul.f32 %v1631, %v1761
          %v1780 = vmul.f32 %v1636, %v1757
          %v1781 = vmul.f32 %v1636, %v1761
          %v1782 = vmul.f32 %v1641, %v1757
          %v1783 = vmul.f32 %v1641, %v1761
          %v1784 = vmul.f32 %v1646, %v1757
          %v1785 = vmul.f32 %v1646, %v1761
          %v1786 = vmul.f32 %v1651, %v1757
          %v1787 = vmul.f32 %v1651, %v1761
          %v1788 = vmul.f32 %v1656, %v1757
          %v1789 = vmul.f32 %v1656, %v1761
          %v1790 = vmul.f32 %v1661, %v1757
          %v1791 = vmul.f32 %v1661, %v1761
          %v1792 = vmul.f32 %v1666, %v1757
          %v1793 = vmul.f32 %v1666, %v1761
          %v1794 = vmul.f32 %v1671, %v1757
          %v1795 = vmul.f32 %v1671, %v1761
          %v1796 = vmul.f32 %v1676, %v1757
          %v1797 = vmul.f32 %v1676, %v1761
          %v1798 = vmul.f32 %v1681, %v1757
          %v1799 = vmul.f32 %v1681, %v1761
          %v1800 = vmul.f32 %v1686, %v1757
          %v1801 = vmul.f32 %v1686, %v1761
          %v1802 = vmul.f32 %v1691, %v1757
          %v1803 = vmul.f32 %v1691, %v1761
          %v1804 = vmul.f32 %v1696, %v1757
          %v1805 = vmul.f32 %v1696, %v1761
          %v1806 = vmul.f32 %v1701, %v1757
          %v1807 = vmul.f32 %v1701, %v1761
          %v1808 = vmul.f32 %v1706, %v1757
          %v1809 = vmul.f32 %v1706, %v1761
          %v1810 = vmul.f32 %v1711, %v1757
          %v1811 = vmul.f32 %v1711, %v1761
          %v1812 = vmul.f32 %v1716, %v1757
          %v1813 = vmul.f32 %v1716, %v1761
          %v1814 = vmul.f32 %v1721, %v1757
          %v1815 = vmul.f32 %v1721, %v1761
          %v1816 = vmul.f32 %v1726, %v1757
          %v1817 = vmul.f32 %v1726, %v1761
          %v1818 = vmul.f32 %v1731, %v1757
          %v1819 = vmul.f32 %v1731, %v1761
          %v1820 = vmul.f32 %v1736, %v1757
          %v1821 = vmul.f32 %v1736, %v1761
          %v1822 = vmul.f32 %v1741, %v1757
          %v1823 = vmul.f32 %v1741, %v1761
          %v1824 = vmul.f32 %v1746, %v1757
          %v1825 = vmul.f32 %v1746, %v1761
          %v1826 = vmul.f32 %v1751, %v1757
          %v1827 = vmul.f32 %v1751, %v1761
          %v1844 = vunpack.c.l.b16 %v1544
          %v1845 = vunpack.c.h.b16 %v1544
          %v1846 = vunpack.c.l.b16 %v1545
          %v1847 = vunpack.c.h.b16 %v1545
          %v1848 = vunpack.c.l.b16 %v1546
          %v1849 = vunpack.c.h.b16 %v1546
          %v1850 = vunpack.c.l.b16 %v1547
          %v1851 = vunpack.c.h.b16 %v1547
          %v1852 = vunpack.c.l.b16 %v1548
          %v1853 = vunpack.c.h.b16 %v1548
          %v1854 = vunpack.c.l.b16 %v1549
          %v1855 = vunpack.c.h.b16 %v1549
          %v1856 = vunpack.c.l.b16 %v1550
          %v1857 = vunpack.c.h.b16 %v1550
          %v1858 = vunpack.c.l.b16 %v1551
          %v1859 = vunpack.c.h.b16 %v1551
          %v1860 = vunpack.c.l.b16 %v1552
          %v1861 = vunpack.c.h.b16 %v1552
          %v1862 = vunpack.c.l.b16 %v1553
          %v1863 = vunpack.c.h.b16 %v1553
          %v1864 = vunpack.c.l.b16 %v1554
          %v1865 = vunpack.c.h.b16 %v1554
          %v1866 = vunpack.c.l.b16 %v1555
          %v1867 = vunpack.c.h.b16 %v1555
          %v1868 = vunpack.c.l.b16 %v1556
          %v1869 = vunpack.c.h.b16 %v1556
          %v1870 = vunpack.c.l.b16 %v1557
          %v1871 = vunpack.c.h.b16 %v1557
          %v1872 = vunpack.c.l.b16 %v1558
          %v1873 = vunpack.c.h.b16 %v1558
          %v1874 = vunpack.c.l.b16 %v1559
          %v1875 = vunpack.c.h.b16 %v1559
          %v1876 = vpack.c.b16 %v1846, %v1844
          %v1877 = vpack.c.b16 %v1847, %v1845
          %v1878 = vpack.c.b16 %v1850, %v1848
          %v1879 = vpack.c.b16 %v1851, %v1849
          %v1880 = vpack.c.b16 %v1854, %v1852
          %v1881 = vpack.c.b16 %v1855, %v1853
          %v1882 = vpack.c.b16 %v1858, %v1856
          %v1883 = vpack.c.b16 %v1859, %v1857
          %v1884 = vpack.c.b16 %v1862, %v1860
          %v1885 = vpack.c.b16 %v1863, %v1861
          %v1886 = vpack.c.b16 %v1866, %v1864
          %v1887 = vpack.c.b16 %v1867, %v1865
          %v1888 = vpack.c.b16 %v1870, %v1868
          %v1889 = vpack.c.b16 %v1871, %v1869
          %v1890 = vpack.c.b16 %v1874, %v1872
          %v1891 = vpack.c.b16 %v1875, %v1873
          %1908 = vmatprep.subr.bf16.mxu0 %v1877
          %1909 = vmatpush1.bf16.msra.mxu0 %v1876
          %1910 = vmatprep.subr.bf16.mxu0 %v1879
          %1911 = vmatpush1.bf16.msra.mxu0 %v1878
          %1912 = vmatprep.subr.bf16.mxu0 %v1881
          %1913 = vmatpush1.bf16.msra.mxu0 %v1880
          %1914 = vmatprep.subr.bf16.mxu0 %v1883
          %1915 = vmatpush1.bf16.msra.mxu0 %v1882
          %1916 = vmatprep.subr.bf16.mxu0 %v1885
          %1917 = vmatpush1.bf16.msra.mxu0 %v1884
          %1918 = vmatprep.subr.bf16.mxu0 %v1887
          %1919 = vmatpush1.bf16.msra.mxu0 %v1886
          %1920 = vmatprep.subr.bf16.mxu0 %v1889
          %1921 = vmatpush1.bf16.msra.mxu0 %v1888
          %1922 = vmatprep.subr.bf16.mxu0 %v1891
          %1923 = vmatpush1.bf16.msra.mxu0 %v1890
          %1924 = vmatprep.subr.bf16.mxu0 0
          %1925 = vmatpush1.bf16.msra.mxu0 0
          %1926 = vmatprep.subr.bf16.mxu0 0
          %1927 = vmatpush1.bf16.msra.mxu0 0
          %1928 = vmatprep.subr.bf16.mxu0 0
          %1929 = vmatpush1.bf16.msra.mxu0 0
          %1930 = vmatprep.subr.bf16.mxu0 0
          %1931 = vmatpush1.bf16.msra.mxu0 0
          %1932 = vmatprep.subr.bf16.mxu0 0
          %1933 = vmatpush1.bf16.msra.mxu0 0
          %1934 = vmatprep.subr.bf16.mxu0 0
          %1935 = vmatpush1.bf16.msra.mxu0 0
          %1936 = vmatprep.subr.bf16.mxu0 0
          %1937 = vmatpush1.bf16.msra.mxu0 0
          %1938 = vmatprep.subr.bf16.mxu0 0
          %1939 = vmatpush1.bf16.msra.mxu0 0
          %1940 = vmatprep.mubr.bf16.mxu0 0
          %1941 = vmatmul.mubr.bf16.gmra.mrb[0].mxu0 %v1528
          %v1942 = vpop.f32.mrb[0].mxu0
          %v1943 = vadd.f32 %v1764, %v1942
          %v1944 = vpop.f32.mrb[0].mxu0
          %v1945 = vadd.f32 %v1765, %v1944
          %v1946 = vpop.f32.mrb[0].mxu0
          %v1947 = vadd.f32 %v1766, %v1946
          %v1948 = vpop.f32.mrb[0].mxu0
          %v1949 = vadd.f32 %v1767, %v1948
          %1950 = vmatprep.mubr.bf16.mxu0 0
          %1951 = vmatmul.mubr.bf16.gmra.mrb[0].mxu0 %v1529
          %v1952 = vpop.f32.mrb[0].mxu0
          %v1953 = vadd.f32 %v1768, %v1952
          %v1954 = vpop.f32.mrb[0].mxu0
          %v1955 = vadd.f32 %v1769, %v1954
          %v1956 = vpop.f32.mrb[0].mxu0
          %v1957 = vadd.f32 %v1770, %v1956
          %v1958 = vpop.f32.mrb[0].mxu0
          %v1959 = vadd.f32 %v1771, %v1958
          %1960 = vmatprep.mubr.bf16.mxu0 0
          %1961 = vmatmul.mubr.bf16.gmra.mrb[0].mxu0 %v1530
          %v1962 = vpop.f32.mrb[0].mxu0
          %v1963 = vadd.f32 %v1772, %v1962
          %v1964 = vpop.f32.mrb[0].mxu0
          %v1965 = vadd.f32 %v1773, %v1964
          %v1966 = vpop.f32.mrb[0].mxu0
          %v1967 = vadd.f32 %v1774, %v1966
          %v1968 = vpop.f32.mrb[0].mxu0
          %v1969 = vadd.f32 %v1775, %v1968
          %1970 = vmatprep.mubr.bf16.mxu0 0
          %1971 = vmatmul.mubr.bf16.gmra.mrb[0].mxu0 %v1531
          %v1972 = vpop.f32.mrb[0].mxu0
          %v1973 = vadd.f32 %v1776, %v1972
          %v1974 = vpop.f32.mrb[0].mxu0
          %v1975 = vadd.f32 %v1777, %v1974
          %v1976 = vpop.f32.mrb[0].mxu0
          %v1977 = vadd.f32 %v1778, %v1976
          %v1978 = vpop.f32.mrb[0].mxu0
          %v1979 = vadd.f32 %v1779, %v1978
          %1980 = vmatprep.mubr.bf16.mxu0 0
          %1981 = vmatmul.mubr.bf16.gmra.mrb[0].mxu0 %v1532
          %v1982 = vpop.f32.mrb[0].mxu0
          %v1983 = vadd.f32 %v1780, %v1982
          %v1984 = vpop.f32.mrb[0].mxu0
          %v1985 = vadd.f32 %v1781, %v1984
          %v1986 = vpop.f32.mrb[0].mxu0
          %v1987 = vadd.f32 %v1782, %v1986
          %v1988 = vpop.f32.mrb[0].mxu0
          %v1989 = vadd.f32 %v1783, %v1988
          %1990 = vmatprep.mubr.bf16.mxu0 0
          %1991 = vmatmul.mubr.bf16.gmra.mrb[0].mxu0 %v1533
          %v1992 = vpop.f32.mrb[0].mxu0
          %v1993 = vadd.f32 %v1784, %v1992
          %v1994 = vpop.f32.mrb[0].mxu0
          %v1995 = vadd.f32 %v1785, %v1994
          %v1996 = vpop.f32.mrb[0].mxu0
          %v1997 = vadd.f32 %v1786, %v1996
          %v1998 = vpop.f32.mrb[0].mxu0
          %v1999 = vadd.f32 %v1787, %v1998
          %2000 = vmatprep.mubr.bf16.mxu0 0
          %2001 = vmatmul.mubr.bf16.gmra.mrb[0].mxu0 %v1534
          %v2002 = vpop.f32.mrb[0].mxu0
          %v2003 = vadd.f32 %v1788, %v2002
          %v2004 = vpop.f32.mrb[0].mxu0
          %v2005 = vadd.f32 %v1789, %v2004
          %v2006 = vpop.f32.mrb[0].mxu0
          %v2007 = vadd.f32 %v1790, %v2006
          %v2008 = vpop.f32.mrb[0].mxu0
          %v2009 = vadd.f32 %v1791, %v2008
          %2010 = vmatprep.mubr.bf16.mxu0 0
          %2011 = vmatmul.mubr.bf16.gmra.mrb[0].mxu0 %v1535
          %v2012 = vpop.f32.mrb[0].mxu0
          %v2013 = vadd.f32 %v1792, %v2012
          %v2014 = vpop.f32.mrb[0].mxu0
          %v2015 = vadd.f32 %v1793, %v2014
          %v2016 = vpop.f32.mrb[0].mxu0
          %v2017 = vadd.f32 %v1794, %v2016
          %v2018 = vpop.f32.mrb[0].mxu0
          %v2019 = vadd.f32 %v1795, %v2018
          %2020 = vmatprep.mubr.bf16.mxu0 0
          %2021 = vmatmul.mubr.bf16.gmra.mrb[0].mxu0 %v1536
          %v2022 = vpop.f32.mrb[0].mxu0
          %v2023 = vadd.f32 %v1796, %v2022
          %v2024 = vpop.f32.mrb[0].mxu0
          %v2025 = vadd.f32 %v1797, %v2024
          %v2026 = vpop.f32.mrb[0].mxu0
          %v2027 = vadd.f32 %v1798, %v2026
          %v2028 = vpop.f32.mrb[0].mxu0
          %v2029 = vadd.f32 %v1799, %v2028
          %2030 = vmatprep.mubr.bf16.mxu0 0
          %2031 = vmatmul.mubr.bf16.gmra.mrb[0].mxu0 %v1537
          %v2032 = vpop.f32.mrb[0].mxu0
          %v2033 = vadd.f32 %v1800, %v2032
          %v2034 = vpop.f32.mrb[0].mxu0
          %v2035 = vadd.f32 %v1801, %v2034
          %v2036 = vpop.f32.mrb[0].mxu0
          %v2037 = vadd.f32 %v1802, %v2036
          %v2038 = vpop.f32.mrb[0].mxu0
          %v2039 = vadd.f32 %v1803, %v2038
          %2040 = vmatprep.mubr.bf16.mxu0 0
          %2041 = vmatmul.mubr.bf16.gmra.mrb[0].mxu0 %v1538
          %v2042 = vpop.f32.mrb[0].mxu0
          %v2043 = vadd.f32 %v1804, %v2042
          %v2044 = vpop.f32.mrb[0].mxu0
          %v2045 = vadd.f32 %v1805, %v2044
          %v2046 = vpop.f32.mrb[0].mxu0
          %v2047 = vadd.f32 %v1806, %v2046
          %v2048 = vpop.f32.mrb[0].mxu0
          %v2049 = vadd.f32 %v1807, %v2048
          %2050 = vmatprep.mubr.bf16.mxu0 0
          %2051 = vmatmul.mubr.bf16.gmra.mrb[0].mxu0 %v1539
          %v2052 = vpop.f32.mrb[0].mxu0
          %v2053 = vadd.f32 %v1808, %v2052
          %v2054 = vpop.f32.mrb[0].mxu0
          %v2055 = vadd.f32 %v1809, %v2054
          %v2056 = vpop.f32.mrb[0].mxu0
          %v2057 = vadd.f32 %v1810, %v2056
          %v2058 = vpop.f32.mrb[0].mxu0
          %v2059 = vadd.f32 %v1811, %v2058
          %2060 = vmatprep.mubr.bf16.mxu0 0
          %2061 = vmatmul.mubr.bf16.gmra.mrb[0].mxu0 %v1540
          %v2062 = vpop.f32.mrb[0].mxu0
          %v2063 = vadd.f32 %v1812, %v2062
          %v2064 = vpop.f32.mrb[0].mxu0
          %v2065 = vadd.f32 %v1813, %v2064
          %v2066 = vpop.f32.mrb[0].mxu0
          %v2067 = vadd.f32 %v1814, %v2066
          %v2068 = vpop.f32.mrb[0].mxu0
          %v2069 = vadd.f32 %v1815, %v2068
          %2070 = vmatprep.mubr.bf16.mxu0 0
          %2071 = vmatmul.mubr.bf16.gmra.mrb[0].mxu0 %v1541
          %v2072 = vpop.f32.mrb[0].mxu0
          %v2073 = vadd.f32 %v1816, %v2072
          %v2074 = vpop.f32.mrb[0].mxu0
          %v2075 = vadd.f32 %v1817, %v2074
          %v2076 = vpop.f32.mrb[0].mxu0
          %v2077 = vadd.f32 %v1818, %v2076
          %v2078 = vpop.f32.mrb[0].mxu0
          %v2079 = vadd.f32 %v1819, %v2078
          %2080 = vmatprep.mubr.bf16.mxu0 0
          %2081 = vmatmul.mubr.bf16.gmra.mrb[0].mxu0 %v1542
          %v2082 = vpop.f32.mrb[0].mxu0
          %v2083 = vadd.f32 %v1820, %v2082
          %v2084 = vpop.f32.mrb[0].mxu0
          %v2085 = vadd.f32 %v1821, %v2084
          %v2086 = vpop.f32.mrb[0].mxu0
          %v2087 = vadd.f32 %v1822, %v2086
          %v2088 = vpop.f32.mrb[0].mxu0
          %v2089 = vadd.f32 %v1823, %v2088
          %2090 = vmatprep.mubr.bf16.mxu0 0
          %2091 = vmatmul.mubr.bf16.gmra.mrb[0].mxu0 %v1543
          %v2092 = vpop.f32.mrb[0].mxu0
          %v2093 = vadd.f32 %v1824, %v2092
          %v2094 = vpop.f32.mrb[0].mxu0
          %v2095 = vadd.f32 %v1825, %v2094
          %v2096 = vpop.f32.mrb[0].mxu0
          %v2097 = vadd.f32 %v1826, %v2096
          %v2098 = vpop.f32.mrb[0].mxu0
          %v2099 = vadd.f32 %v1827, %v2098
          %2100 = vdwg.mxu0
          %v2101 = vld [vmem:[%s8] sm:$0x3]
          %v2102 = vadd.f32 %v2101, 1e-05
          %v2103 = vrsqrt.pop %v2102
          %v2104 = vld [vmem:[%s7] sm:$0x3]
          %v2106 = vlaneseq
          %v2107 = vshrl.u32 %v2106, 7
          %v2108 = vsub.s32 0, %v2107
          %v2109 = vrot.slane %v2104, %v2108
          %v2110 = vlaneseq
          %v2111 = vshrl.u32 %v2110, 7
          %v2112 = vsub.s32 1, %v2111
          %v2113 = vrot.slane %v2104, %v2112
          %v2116 = vsub.f32 %v1943, %v2109
          %v2117 = vsub.f32 %v1945, %v2113
          %v2118 = vsub.f32 %v1947, %v2109
          %v2119 = vsub.f32 %v1949, %v2113
          %v2120 = vsub.f32 %v1953, %v2109
          %v2121 = vsub.f32 %v1955, %v2113
          %v2122 = vsub.f32 %v1957, %v2109
          %v2123 = vsub.f32 %v1959, %v2113
          %v2124 = vsub.f32 %v1963, %v2109
          %v2125 = vsub.f32 %v1965, %v2113
          %v2126 = vsub.f32 %v1967, %v2109
          %v2127 = vsub.f32 %v1969, %v2113
          %v2128 = vsub.f32 %v1973, %v2109
          %v2129 = vsub.f32 %v1975, %v2113
          %v2130 = vsub.f32 %v1977, %v2109
          %v2131 = vsub.f32 %v1979, %v2113
          %v2132 = vsub.f32 %v1983, %v2109
          %v2133 = vsub.f32 %v1985, %v2113
          %v2134 = vsub.f32 %v1987, %v2109
          %v2135 = vsub.f32 %v1989, %v2113
          %v2136 = vsub.f32 %v1993, %v2109
          %v2137 = vsub.f32 %v1995, %v2113
          %v2138 = vsub.f32 %v1997, %v2109
          %v2139 = vsub.f32 %v1999, %v2113
          %v2140 = vsub.f32 %v2003, %v2109
          %v2141 = vsub.f32 %v2005, %v2113
          %v2142 = vsub.f32 %v2007, %v2109
          %v2143 = vsub.f32 %v2009, %v2113
          %v2144 = vsub.f32 %v2013, %v2109
          %v2145 = vsub.f32 %v2015, %v2113
          %v2146 = vsub.f32 %v2017, %v2109
          %v2147 = vsub.f32 %v2019, %v2113
          %v2148 = vsub.f32 %v2023, %v2109
          %v2149 = vsub.f32 %v2025, %v2113
          %v2150 = vsub.f32 %v2027, %v2109
          %v2151 = vsub.f32 %v2029, %v2113
          %v2152 = vsub.f32 %v2033, %v2109
          %v2153 = vsub.f32 %v2035, %v2113
          %v2154 = vsub.f32 %v2037, %v2109
          %v2155 = vsub.f32 %v2039, %v2113
          %v2156 = vsub.f32 %v2043, %v2109
          %v2157 = vsub.f32 %v2045, %v2113
          %v2158 = vsub.f32 %v2047, %v2109
          %v2159 = vsub.f32 %v2049, %v2113
          %v2160 = vsub.f32 %v2053, %v2109
          %v2161 = vsub.f32 %v2055, %v2113
          %v2162 = vsub.f32 %v2057, %v2109
          %v2163 = vsub.f32 %v2059, %v2113
          %v2164 = vsub.f32 %v2063, %v2109
          %v2165 = vsub.f32 %v2065, %v2113
          %v2166 = vsub.f32 %v2067, %v2109
          %v2167 = vsub.f32 %v2069, %v2113
          %v2168 = vsub.f32 %v2073, %v2109
          %v2169 = vsub.f32 %v2075, %v2113
          %v2170 = vsub.f32 %v2077, %v2109
          %v2171 = vsub.f32 %v2079, %v2113
          %v2172 = vsub.f32 %v2083, %v2109
          %v2173 = vsub.f32 %v2085, %v2113
          %v2174 = vsub.f32 %v2087, %v2109
          %v2175 = vsub.f32 %v2089, %v2113
          %v2176 = vsub.f32 %v2093, %v2109
          %v2177 = vsub.f32 %v2095, %v2113
          %v2178 = vsub.f32 %v2097, %v2109
          %v2179 = vsub.f32 %v2099, %v2113
          %v2181 = vlaneseq
          %v2182 = vshrl.u32 %v2181, 7
          %v2183 = vsub.s32 0, %v2182
          %v2184 = vrot.slane %v2103, %v2183
          %v2185 = vlaneseq
          %v2186 = vshrl.u32 %v2185, 7
          %v2187 = vsub.s32 1, %v2186
          %v2188 = vrot.slane %v2103, %v2187
          %v2191 = vmul.f32 %v2116, %v2184
          %v2192 = vmul.f32 %v2117, %v2188
          %v2193 = vmul.f32 %v2118, %v2184
          %v2194 = vmul.f32 %v2119, %v2188
          %v2195 = vmul.f32 %v2120, %v2184
          %v2196 = vmul.f32 %v2121, %v2188
          %v2197 = vmul.f32 %v2122, %v2184
          %v2198 = vmul.f32 %v2123, %v2188
          %v2199 = vmul.f32 %v2124, %v2184
          %v2200 = vmul.f32 %v2125, %v2188
          %v2201 = vmul.f32 %v2126, %v2184
          %v2202 = vmul.f32 %v2127, %v2188
          %v2203 = vmul.f32 %v2128, %v2184
          %v2204 = vmul.f32 %v2129, %v2188
          %v2205 = vmul.f32 %v2130, %v2184
          %v2206 = vmul.f32 %v2131, %v2188
          %v2207 = vmul.f32 %v2132, %v2184
          %v2208 = vmul.f32 %v2133, %v2188
          %v2209 = vmul.f32 %v2134, %v2184
          %v2210 = vmul.f32 %v2135, %v2188
          %v2211 = vmul.f32 %v2136, %v2184
          %v2212 = vmul.f32 %v2137, %v2188
          %v2213 = vmul.f32 %v2138, %v2184
          %v2214 = vmul.f32 %v2139, %v2188
          %v2215 = vmul.f32 %v2140, %v2184
          %v2216 = vmul.f32 %v2141, %v2188
          %v2217 = vmul.f32 %v2142, %v2184
          %v2218 = vmul.f32 %v2143, %v2188
          %v2219 = vmul.f32 %v2144, %v2184
          %v2220 = vmul.f32 %v2145, %v2188
          %v2221 = vmul.f32 %v2146, %v2184
          %v2222 = vmul.f32 %v2147, %v2188
          %v2223 = vmul.f32 %v2148, %v2184
          %v2224 = vmul.f32 %v2149, %v2188
          %v2225 = vmul.f32 %v2150, %v2184
          %v2226 = vmul.f32 %v2151, %v2188
          %v2227 = vmul.f32 %v2152, %v2184
          %v2228 = vmul.f32 %v2153, %v2188
          %v2229 = vmul.f32 %v2154, %v2184
          %v2230 = vmul.f32 %v2155, %v2188
          %v2231 = vmul.f32 %v2156, %v2184
          %v2232 = vmul.f32 %v2157, %v2188
          %v2233 = vmul.f32 %v2158, %v2184
          %v2234 = vmul.f32 %v2159, %v2188
          %v2235 = vmul.f32 %v2160, %v2184
          %v2236 = vmul.f32 %v2161, %v2188
          %v2237 = vmul.f32 %v2162, %v2184
          %v2238 = vmul.f32 %v2163, %v2188
          %v2239 = vmul.f32 %v2164, %v2184
          %v2240 = vmul.f32 %v2165, %v2188
          %v2241 = vmul.f32 %v2166, %v2184
          %v2242 = vmul.f32 %v2167, %v2188
          %v2243 = vmul.f32 %v2168, %v2184
          %v2244 = vmul.f32 %v2169, %v2188
          %v2245 = vmul.f32 %v2170, %v2184
          %v2246 = vmul.f32 %v2171, %v2188
          %v2247 = vmul.f32 %v2172, %v2184
          %v2248 = vmul.f32 %v2173, %v2188
          %v2249 = vmul.f32 %v2174, %v2184
          %v2250 = vmul.f32 %v2175, %v2188
          %v2251 = vmul.f32 %v2176, %v2184
          %v2252 = vmul.f32 %v2177, %v2188
          %v2253 = vmul.f32 %v2178, %v2184
          %v2254 = vmul.f32 %v2179, %v2188
          %v2255 = vld [vmem:[%s5] sm:$0x3]
          %v2257 = vlaneseq
          %v2258 = vshrl.u32 %v2257, 7
          %v2259 = vsub.s32 0, %v2258
          %v2260 = vrot.slane %v2255, %v2259
          %v2261 = vlaneseq
          %v2262 = vshrl.u32 %v2261, 7
          %v2263 = vsub.s32 1, %v2262
          %v2264 = vrot.slane %v2255, %v2263
          %v2267 = vmul.f32 %v2191, %v2260
          %v2268 = vmul.f32 %v2192, %v2264
          %v2269 = vmul.f32 %v2193, %v2260
          %v2270 = vmul.f32 %v2194, %v2264
          %v2271 = vmul.f32 %v2195, %v2260
          %v2272 = vmul.f32 %v2196, %v2264
          %v2273 = vmul.f32 %v2197, %v2260
          %v2274 = vmul.f32 %v2198, %v2264
          %v2275 = vmul.f32 %v2199, %v2260
          %v2276 = vmul.f32 %v2200, %v2264
          %v2277 = vmul.f32 %v2201, %v2260
          %v2278 = vmul.f32 %v2202, %v2264
          %v2279 = vmul.f32 %v2203, %v2260
          %v2280 = vmul.f32 %v2204, %v2264
          %v2281 = vmul.f32 %v2205, %v2260
          %v2282 = vmul.f32 %v2206, %v2264
          %v2283 = vmul.f32 %v2207, %v2260
          %v2284 = vmul.f32 %v2208, %v2264
          %v2285 = vmul.f32 %v2209, %v2260
          %v2286 = vmul.f32 %v2210, %v2264
          %v2287 = vmul.f32 %v2211, %v2260
          %v2288 = vmul.f32 %v2212, %v2264
          %v2289 = vmul.f32 %v2213, %v2260
          %v2290 = vmul.f32 %v2214, %v2264
          %v2291 = vmul.f32 %v2215, %v2260
          %v2292 = vmul.f32 %v2216, %v2264
          %v2293 = vmul.f32 %v2217, %v2260
          %v2294 = vmul.f32 %v2218, %v2264
          %v2295 = vmul.f32 %v2219, %v2260
          %v2296 = vmul.f32 %v2220, %v2264
          %v2297 = vmul.f32 %v2221, %v2260
          %v2298 = vmul.f32 %v2222, %v2264
          %v2299 = vmul.f32 %v2223, %v2260
          %v2300 = vmul.f32 %v2224, %v2264
          %v2301 = vmul.f32 %v2225, %v2260
          %v2302 = vmul.f32 %v2226, %v2264
          %v2303 = vmul.f32 %v2227, %v2260
          %v2304 = vmul.f32 %v2228, %v2264
          %v2305 = vmul.f32 %v2229, %v2260
          %v2306 = vmul.f32 %v2230, %v2264
          %v2307 = vmul.f32 %v2231, %v2260
          %v2308 = vmul.f32 %v2232, %v2264
          %v2309 = vmul.f32 %v2233, %v2260
          %v2310 = vmul.f32 %v2234, %v2264
          %v2311 = vmul.f32 %v2235, %v2260
          %v2312 = vmul.f32 %v2236, %v2264
          %v2313 = vmul.f32 %v2237, %v2260
          %v2314 = vmul.f32 %v2238, %v2264
          %v2315 = vmul.f32 %v2239, %v2260
          %v2316 = vmul.f32 %v2240, %v2264
          %v2317 = vmul.f32 %v2241, %v2260
          %v2318 = vmul.f32 %v2242, %v2264
          %v2319 = vmul.f32 %v2243, %v2260
          %v2320 = vmul.f32 %v2244, %v2264
          %v2321 = vmul.f32 %v2245, %v2260
          %v2322 = vmul.f32 %v2246, %v2264
          %v2323 = vmul.f32 %v2247, %v2260
          %v2324 = vmul.f32 %v2248, %v2264
          %v2325 = vmul.f32 %v2249, %v2260
          %v2326 = vmul.f32 %v2250, %v2264
          %v2327 = vmul.f32 %v2251, %v2260
          %v2328 = vmul.f32 %v2252, %v2264
          %v2329 = vmul.f32 %v2253, %v2260
          %v2330 = vmul.f32 %v2254, %v2264
          %v2331 = vld [vmem:[%s6] sm:$0x3]
          %v2333 = vlaneseq
          %v2334 = vshrl.u32 %v2333, 7
          %v2335 = vsub.s32 0, %v2334
          %v2336 = vrot.slane %v2331, %v2335
          %v2337 = vlaneseq
          %v2338 = vshrl.u32 %v2337, 7
          %v2339 = vsub.s32 1, %v2338
          %v2340 = vrot.slane %v2331, %v2339
          %v2343 = vadd.f32 %v2267, %v2336
          %v2344 = vadd.f32 %v2268, %v2340
          %v2345 = vadd.f32 %v2269, %v2336
          %v2346 = vadd.f32 %v2270, %v2340
          %v2347 = vadd.f32 %v2271, %v2336
          %v2348 = vadd.f32 %v2272, %v2340
          %v2349 = vadd.f32 %v2273, %v2336
          %v2350 = vadd.f32 %v2274, %v2340
          %v2351 = vadd.f32 %v2275, %v2336
          %v2352 = vadd.f32 %v2276, %v2340
          %v2353 = vadd.f32 %v2277, %v2336
          %v2354 = vadd.f32 %v2278, %v2340
          %v2355 = vadd.f32 %v2279, %v2336
          %v2356 = vadd.f32 %v2280, %v2340
          %v2357 = vadd.f32 %v2281, %v2336
          %v2358 = vadd.f32 %v2282, %v2340
          %v2359 = vadd.f32 %v2283, %v2336
          %v2360 = vadd.f32 %v2284, %v2340
          %v2361 = vadd.f32 %v2285, %v2336
          %v2362 = vadd.f32 %v2286, %v2340
          %v2363 = vadd.f32 %v2287, %v2336
          %v2364 = vadd.f32 %v2288, %v2340
          %v2365 = vadd.f32 %v2289, %v2336
          %v2366 = vadd.f32 %v2290, %v2340
          %v2367 = vadd.f32 %v2291, %v2336
          %v2368 = vadd.f32 %v2292, %v2340
          %v2369 = vadd.f32 %v2293, %v2336
          %v2370 = vadd.f32 %v2294, %v2340
          %v2371 = vadd.f32 %v2295, %v2336
          %v2372 = vadd.f32 %v2296, %v2340
          %v2373 = vadd.f32 %v2297, %v2336
          %v2374 = vadd.f32 %v2298, %v2340
          %v2375 = vadd.f32 %v2299, %v2336
          %v2376 = vadd.f32 %v2300, %v2340
          %v2377 = vadd.f32 %v2301, %v2336
          %v2378 = vadd.f32 %v2302, %v2340
          %v2379 = vadd.f32 %v2303, %v2336
          %v2380 = vadd.f32 %v2304, %v2340
          %v2381 = vadd.f32 %v2305, %v2336
          %v2382 = vadd.f32 %v2306, %v2340
          %v2383 = vadd.f32 %v2307, %v2336
          %v2384 = vadd.f32 %v2308, %v2340
          %v2385 = vadd.f32 %v2309, %v2336
          %v2386 = vadd.f32 %v2310, %v2340
          %v2387 = vadd.f32 %v2311, %v2336
          %v2388 = vadd.f32 %v2312, %v2340
          %v2389 = vadd.f32 %v2313, %v2336
          %v2390 = vadd.f32 %v2314, %v2340
          %v2391 = vadd.f32 %v2315, %v2336
          %v2392 = vadd.f32 %v2316, %v2340
          %v2393 = vadd.f32 %v2317, %v2336
          %v2394 = vadd.f32 %v2318, %v2340
          %v2395 = vadd.f32 %v2319, %v2336
          %v2396 = vadd.f32 %v2320, %v2340
          %v2397 = vadd.f32 %v2321, %v2336
          %v2398 = vadd.f32 %v2322, %v2340
          %v2399 = vadd.f32 %v2323, %v2336
          %v2400 = vadd.f32 %v2324, %v2340
          %v2401 = vadd.f32 %v2325, %v2336
          %v2402 = vadd.f32 %v2326, %v2340
          %v2403 = vadd.f32 %v2327, %v2336
          %v2404 = vadd.f32 %v2328, %v2340
          %v2405 = vadd.f32 %v2329, %v2336
          %v2406 = vadd.f32 %v2330, %v2340
          %v2407 = vmax.f32 %v2343, 0.0
          %v2408 = vmax.f32 %v2344, 0.0
          %v2409 = vmax.f32 %v2345, 0.0
          %v2410 = vmax.f32 %v2346, 0.0
          %v2411 = vmax.f32 %v2347, 0.0
          %v2412 = vmax.f32 %v2348, 0.0
          %v2413 = vmax.f32 %v2349, 0.0
          %v2414 = vmax.f32 %v2350, 0.0
          %v2415 = vmax.f32 %v2351, 0.0
          %v2416 = vmax.f32 %v2352, 0.0
          %v2417 = vmax.f32 %v2353, 0.0
          %v2418 = vmax.f32 %v2354, 0.0
          %v2419 = vmax.f32 %v2355, 0.0
          %v2420 = vmax.f32 %v2356, 0.0
          %v2421 = vmax.f32 %v2357, 0.0
          %v2422 = vmax.f32 %v2358, 0.0
          %v2423 = vmax.f32 %v2359, 0.0
          %v2424 = vmax.f32 %v2360, 0.0
          %v2425 = vmax.f32 %v2361, 0.0
          %v2426 = vmax.f32 %v2362, 0.0
          %v2427 = vmax.f32 %v2363, 0.0
          %v2428 = vmax.f32 %v2364, 0.0
          %v2429 = vmax.f32 %v2365, 0.0
          %v2430 = vmax.f32 %v2366, 0.0
          %v2431 = vmax.f32 %v2367, 0.0
          %v2432 = vmax.f32 %v2368, 0.0
          %v2433 = vmax.f32 %v2369, 0.0
          %v2434 = vmax.f32 %v2370, 0.0
          %v2435 = vmax.f32 %v2371, 0.0
          %v2436 = vmax.f32 %v2372, 0.0
          %v2437 = vmax.f32 %v2373, 0.0
          %v2438 = vmax.f32 %v2374, 0.0
          %v2439 = vmax.f32 %v2375, 0.0
          %v2440 = vmax.f32 %v2376, 0.0
          %v2441 = vmax.f32 %v2377, 0.0
          %v2442 = vmax.f32 %v2378, 0.0
          %v2443 = vmax.f32 %v2379, 0.0
          %v2444 = vmax.f32 %v2380, 0.0
          %v2445 = vmax.f32 %v2381, 0.0
          %v2446 = vmax.f32 %v2382, 0.0
          %v2447 = vmax.f32 %v2383, 0.0
          %v2448 = vmax.f32 %v2384, 0.0
          %v2449 = vmax.f32 %v2385, 0.0
          %v2450 = vmax.f32 %v2386, 0.0
          %v2451 = vmax.f32 %v2387, 0.0
          %v2452 = vmax.f32 %v2388, 0.0
          %v2453 = vmax.f32 %v2389, 0.0
          %v2454 = vmax.f32 %v2390, 0.0
          %v2455 = vmax.f32 %v2391, 0.0
          %v2456 = vmax.f32 %v2392, 0.0
          %v2457 = vmax.f32 %v2393, 0.0
          %v2458 = vmax.f32 %v2394, 0.0
          %v2459 = vmax.f32 %v2395, 0.0
          %v2460 = vmax.f32 %v2396, 0.0
          %v2461 = vmax.f32 %v2397, 0.0
          %v2462 = vmax.f32 %v2398, 0.0
          %v2463 = vmax.f32 %v2399, 0.0
          %v2464 = vmax.f32 %v2400, 0.0
          %v2465 = vmax.f32 %v2401, 0.0
          %v2466 = vmax.f32 %v2402, 0.0
          %v2467 = vmax.f32 %v2403, 0.0
          %v2468 = vmax.f32 %v2404, 0.0
          %v2469 = vmax.f32 %v2405, 0.0
          %v2470 = vmax.f32 %v2406, 0.0
          %v2471 = vpack.c.bf16 %v2409, %v2407
          %v2472 = vpack.c.bf16 %v2410, %v2408
          %v2473 = vpack.c.bf16 %v2413, %v2411
          %v2474 = vpack.c.bf16 %v2414, %v2412
          %v2475 = vpack.c.bf16 %v2417, %v2415
          %v2476 = vpack.c.bf16 %v2418, %v2416
          %v2477 = vpack.c.bf16 %v2421, %v2419
          %v2478 = vpack.c.bf16 %v2422, %v2420
          %v2479 = vpack.c.bf16 %v2425, %v2423
          %v2480 = vpack.c.bf16 %v2426, %v2424
          %v2481 = vpack.c.bf16 %v2429, %v2427
          %v2482 = vpack.c.bf16 %v2430, %v2428
          %v2483 = vpack.c.bf16 %v2433, %v2431
          %v2484 = vpack.c.bf16 %v2434, %v2432
          %v2485 = vpack.c.bf16 %v2437, %v2435
          %v2486 = vpack.c.bf16 %v2438, %v2436
          %v2487 = vpack.c.bf16 %v2441, %v2439
          %v2488 = vpack.c.bf16 %v2442, %v2440
          %v2489 = vpack.c.bf16 %v2445, %v2443
          %v2490 = vpack.c.bf16 %v2446, %v2444
          %v2491 = vpack.c.bf16 %v2449, %v2447
          %v2492 = vpack.c.bf16 %v2450, %v2448
          %v2493 = vpack.c.bf16 %v2453, %v2451
          %v2494 = vpack.c.bf16 %v2454, %v2452
          %v2495 = vpack.c.bf16 %v2457, %v2455
          %v2496 = vpack.c.bf16 %v2458, %v2456
          %v2497 = vpack.c.bf16 %v2461, %v2459
          %v2498 = vpack.c.bf16 %v2462, %v2460
          %v2499 = vpack.c.bf16 %v2465, %v2463
          %v2500 = vpack.c.bf16 %v2466, %v2464
          %v2501 = vpack.c.bf16 %v2469, %v2467
          %v2502 = vpack.c.bf16 %v2470, %v2468
          %v2535 = vunpack.c.l.b16 %v2471
          %v2536 = vunpack.c.l.b16 %v2472
          %v2537 = vunpack.c.h.b16 %v2471
          %v2538 = vunpack.c.h.b16 %v2472
          %v2539 = vunpack.c.l.b16 %v2473
          %v2540 = vunpack.c.l.b16 %v2474
          %v2541 = vunpack.c.h.b16 %v2473
          %v2542 = vunpack.c.h.b16 %v2474
          %v2543 = vunpack.c.l.b16 %v2475
          %v2544 = vunpack.c.l.b16 %v2476
          %v2545 = vunpack.c.h.b16 %v2475
          %v2546 = vunpack.c.h.b16 %v2476
          %v2547 = vunpack.c.l.b16 %v2477
          %v2548 = vunpack.c.l.b16 %v2478
          %v2549 = vunpack.c.h.b16 %v2477
          %v2550 = vunpack.c.h.b16 %v2478
          %v2551 = vunpack.c.l.b16 %v2479
          %v2552 = vunpack.c.l.b16 %v2480
          %v2553 = vunpack.c.h.b16 %v2479
          %v2554 = vunpack.c.h.b16 %v2480
          %v2555 = vunpack.c.l.b16 %v2481
          %v2556 = vunpack.c.l.b16 %v2482
          %v2557 = vunpack.c.h.b16 %v2481
          %v2558 = vunpack.c.h.b16 %v2482
          %v2559 = vunpack.c.l.b16 %v2483
          %v2560 = vunpack.c.l.b16 %v2484
          %v2561 = vunpack.c.h.b16 %v2483
          %v2562 = vunpack.c.h.b16 %v2484
          %v2563 = vunpack.c.l.b16 %v2485
          %v2564 = vunpack.c.l.b16 %v2486
          %v2565 = vunpack.c.h.b16 %v2485
          %v2566 = vunpack.c.h.b16 %v2486
          %v2567 = vunpack.c.l.b16 %v2487
          %v2568 = vunpack.c.l.b16 %v2488
          %v2569 = vunpack.c.h.b16 %v2487
          %v2570 = vunpack.c.h.b16 %v2488
          %v2571 = vunpack.c.l.b16 %v2489
          %v2572 = vunpack.c.l.b16 %v2490
          %v2573 = vunpack.c.h.b16 %v2489
          %v2574 = vunpack.c.h.b16 %v2490
          %v2575 = vunpack.c.l.b16 %v2491
          %v2576 = vunpack.c.l.b16 %v2492
          %v2577 = vunpack.c.h.b16 %v2491
          %v2578 = vunpack.c.h.b16 %v2492
          %v2579 = vunpack.c.l.b16 %v2493
          %v2580 = vunpack.c.l.b16 %v2494
          %v2581 = vunpack.c.h.b16 %v2493
          %v2582 = vunpack.c.h.b16 %v2494
          %v2583 = vunpack.c.l.b16 %v2495
          %v2584 = vunpack.c.l.b16 %v2496
          %v2585 = vunpack.c.h.b16 %v2495
          %v2586 = vunpack.c.h.b16 %v2496
          %v2587 = vunpack.c.l.b16 %v2497
          %v2588 = vunpack.c.l.b16 %v2498
          %v2589 = vunpack.c.h.b16 %v2497
          %v2590 = vunpack.c.h.b16 %v2498
          %v2591 = vunpack.c.l.b16 %v2499
          %v2592 = vunpack.c.l.b16 %v2500
          %v2593 = vunpack.c.h.b16 %v2499
          %v2594 = vunpack.c.h.b16 %v2500
          %v2595 = vunpack.c.l.b16 %v2501
          %v2596 = vunpack.c.l.b16 %v2502
          %v2597 = vunpack.c.h.b16 %v2501
          %v2598 = vunpack.c.h.b16 %v2502
          %v2599 = vpack.c.b16 %v2536, %v2535
          %v2600 = vpack.c.b16 %v2538, %v2537
          %v2601 = vpack.c.b16 %v2540, %v2539
          %v2602 = vpack.c.b16 %v2542, %v2541
          %v2603 = vpack.c.b16 %v2544, %v2543
          %v2604 = vpack.c.b16 %v2546, %v2545
          %v2605 = vpack.c.b16 %v2548, %v2547
          %v2606 = vpack.c.b16 %v2550, %v2549
          %v2607 = vpack.c.b16 %v2552, %v2551
          %v2608 = vpack.c.b16 %v2554, %v2553
          %v2609 = vpack.c.b16 %v2556, %v2555
          %v2610 = vpack.c.b16 %v2558, %v2557
          %v2611 = vpack.c.b16 %v2560, %v2559
          %v2612 = vpack.c.b16 %v2562, %v2561
          %v2613 = vpack.c.b16 %v2564, %v2563
          %v2614 = vpack.c.b16 %v2566, %v2565
          %v2615 = vpack.c.b16 %v2568, %v2567
          %v2616 = vpack.c.b16 %v2570, %v2569
          %v2617 = vpack.c.b16 %v2572, %v2571
          %v2618 = vpack.c.b16 %v2574, %v2573
          %v2619 = vpack.c.b16 %v2576, %v2575
          %v2620 = vpack.c.b16 %v2578, %v2577
          %v2621 = vpack.c.b16 %v2580, %v2579
          %v2622 = vpack.c.b16 %v2582, %v2581
          %v2623 = vpack.c.b16 %v2584, %v2583
          %v2624 = vpack.c.b16 %v2586, %v2585
          %v2625 = vpack.c.b16 %v2588, %v2587
          %v2626 = vpack.c.b16 %v2590, %v2589
          %v2627 = vpack.c.b16 %v2592, %v2591
          %v2628 = vpack.c.b16 %v2594, %v2593
          %v2629 = vpack.c.b16 %v2596, %v2595
          %v2630 = vpack.c.b16 %v2598, %v2597
          %2663 = vst [vmem:[%s383] sm:$0xff] %v2599
          %2664 = vst [vmem:[%s383 + $0x8] sm:$0xff] %v2600
          %2665 = vst [vmem:[%s383 + $0x10] sm:$0xff] %v2601
          %2666 = vst [vmem:[%s383 + $0x18] sm:$0xff] %v2602
          %2667 = vst [vmem:[%s383 + $0x20] sm:$0xff] %v2603
          %2668 = vst [vmem:[%s383 + $0x28] sm:$0xff] %v2604
          %2669 = vst [vmem:[%s383 + $0x30] sm:$0xff] %v2605
          %2670 = vst [vmem:[%s383 + $0x38] sm:$0xff] %v2606
          %2671 = vst [vmem:[%s383 + $0x40] sm:$0xff] %v2607
          %2672 = vst [vmem:[%s383 + $0x48] sm:$0xff] %v2608
          %2673 = vst [vmem:[%s383 + $0x50] sm:$0xff] %v2609
          %2674 = vst [vmem:[%s383 + $0x58] sm:$0xff] %v2610
          %2675 = vst [vmem:[%s383 + $0x60] sm:$0xff] %v2611
          %2676 = vst [vmem:[%s383 + $0x68] sm:$0xff] %v2612
          %2677 = vst [vmem:[%s383 + $0x70] sm:$0xff] %v2613
          %2678 = vst [vmem:[%s383 + $0x78] sm:$0xff] %v2614
          %2679 = vst [vmem:[%s383 + $0x80] sm:$0xff] %v2615
          %2680 = vst [vmem:[%s383 + $0x88] sm:$0xff] %v2616
          %2681 = vst [vmem:[%s383 + $0x90] sm:$0xff] %v2617
          %2682 = vst [vmem:[%s383 + $0x98] sm:$0xff] %v2618
          %2683 = vst [vmem:[%s383 + $0xa0] sm:$0xff] %v2619
          %2684 = vst [vmem:[%s383 + $0xa8] sm:$0xff] %v2620
          %2685 = vst [vmem:[%s383 + $0xb0] sm:$0xff] %v2621
          %2686 = vst [vmem:[%s383 + $0xb8] sm:$0xff] %v2622
          %2687 = vst [vmem:[%s383 + $0xc0] sm:$0xff] %v2623
          %2688 = vst [vmem:[%s383 + $0xc8] sm:$0xff] %v2624
          %2689 = vst [vmem:[%s383 + $0xd0] sm:$0xff] %v2625
          %2690 = vst [vmem:[%s383 + $0xd8] sm:$0xff] %v2626
          %2691 = vst [vmem:[%s383 + $0xe0] sm:$0xff] %v2627
          %2692 = vst [vmem:[%s383 + $0xe8] sm:$0xff] %v2628
          %2693 = vst [vmem:[%s383 + $0xf0] sm:$0xff] %v2629
          %2694 = vst [vmem:[%s383 + $0xf8] sm:$0xff] %v2630
        $region68: #{tpu_custom_call.1} parent=55 // pred_fallthru
          _
        %s2695 = sand.u32 %s247, 1
        %s2696 = scalar_lea.sflag [#allocation5], %s2695
        %s2697 = sand.u32 %s247, 1
        %s2698 = smul.addr %s2697, 256
        %s2699 = scalar_lea.vmem [#allocation6], %s2698
        // Predicated region
        $region69: #{tpu_custom_call.1} parent=55 // pred_check
          %p2700 = pneg %p257
        $region70: #{tpu_custom_call.1} parent=55 // pred_check_branch
          %2702 = sbr.rel (%p2700) target = $region72
        $region71: #{tpu_custom_call.1} parent=55 // pred_region
          %s2703 = smul.u32 32, %s30
          %s2705 = ssub.s32 4096, 4096
          %2706 = vsyncadd %s2696, %s2705
          %s2707 = smul.addr %s2703, 2
          %s2708 = smul.addr %s2707, 64
          %s2709 = scalar_lea.hbm %s9, %s2708
          %s2710 = sshll.u32 %s2699, 4
          %s2711 = int_to_ptr.vmem [resolvable:$true] %s2710
          %2716 = dma.vmem_to_hbm [thread:$0]  %s2711, 4096, %s2709, %s2696, 128, 128, 8
        $region72: #{tpu_custom_call.1} parent=55 // pred_fallthru
          _
      $region56: #{tpu_custom_call.1} parent=5 // pred_fallthru
        _
      %p2717 = scmp.le.s32.totalorder 2, %s21
      // Predicated region
      $region73: #{tpu_custom_call.1} parent=5 // pred_check
        %p2718 = pneg %p2717
      $region74: #{tpu_custom_call.1} parent=5 // pred_check_branch
        %2720 = sbr.rel (%p2718) target = $region76
      $region75: #{tpu_custom_call.1} parent=5 // pred_region
        %s2721 = ssub.s32 %s21, 2
        // Predicated region
        $region77: #{tpu_custom_call.1} parent=75 // pred_check
          %p2722 = pneg %p263
        $region78: #{tpu_custom_call.1} parent=75 // pred_check_branch
          %2724 = sbr.rel (%p2722) target = $region80
        $region79: #{tpu_custom_call.1} parent=75 // pred_region
          %s2725 = sand.u32 %s248, 1
          %s2726 = scalar_lea.sflag [#allocation5], %s2725
          %s2727 = sand.u32 %s248, 1
          %s2728 = smul.addr %s2727, 256
          %s2729 = scalar_lea.vmem [#allocation6], %s2728
          %2730 = dma.done %s2726, 4096
        $region80: #{tpu_custom_call.1} parent=75 // pred_fallthru
          _
      $region76: #{tpu_custom_call.1} parent=5 // pred_fallthru
        _
    $region6: #{tpu_custom_call.1} parent=1 // loop_footer
      %s25 = sadd.s32 1, %s21
    $region7: #{tpu_custom_call.1} parent=1 // loop_footer_branch
      %20 = sbr.rel target = $region3
    $region8: #{tpu_custom_call.1} parent=1 // loop_exit
      _
    %2731 = vsyncpa [#allocation4], 1
    %s2732 = scalar_lea.sflag [#allocation4], 1
    %2733 = vsyncpa %s2732, 1
    %2734 = vsyncpa [#allocation5], 1
    %s2735 = scalar_lea.sflag [#allocation5], 1
    %2736 = vsyncpa %s2735, 1

</llo_original>
